<compile_context>
chip_gen: v6e
topology: v6e:2x2x1
jax: 0.10.0
libtpu: 0.0.40
codegen_flags: <defaults>
</compile_context>

<pallas_src>
import jax
import jax.numpy as jnp
from jax.experimental import pallas as pl
from jax.experimental.pallas import tpu as pltpu

BN_EPS = 1e-5


def _round_up(x, m):
    return ((x + m - 1) // m) * m


# --------------------------------------------------------------------------- #
# Kernel
# --------------------------------------------------------------------------- #
def make_kernel(num_layers, k, tn, n_valid, n_pad, c_in_pad, c_last):
    """Refs: x, (w,g,b) x L, | mx, mn, scale_out, shift_out, | (sum,sq) x L, (scale,shift) x (L-1)."""
    rows = k * tn
    inv_r = 1.0 / float(n_valid * k)        # BN divisor = number of REAL pixels
    needs_mask = n_pad != n_valid           # node-padding rows exist?
    n_tiles = n_pad // tn

    def kernel(*refs):
        x_ref = refs[0]
        w_refs = [refs[1 + 3 * l + 0] for l in range(num_layers)]
        g_refs = [refs[1 + 3 * l + 1] for l in range(num_layers)]
        b_refs = [refs[1 + 3 * l + 2] for l in range(num_layers)]
        o = 1 + 3 * num_layers
        mx_ref, mn_ref, s_out_ref, t_out_ref = refs[o:o + 4]
        sc = refs[o + 4:]
        sum_refs = [sc[2 * l + 0] for l in range(num_layers)]
        sq_refs = [sc[2 * l + 1] for l in range(num_layers)]
        aff = sc[2 * num_layers:]
        scale_refs = [aff[2 * l + 0] for l in range(num_layers - 1)]
        shift_refs = [aff[2 * l + 1] for l in range(num_layers - 1)]

        ph = pl.program_id(1)                # BN phase: phase l owns layer l's stats
        t = pl.program_id(2)                 # row (node) tile

        # Per-branch re-initialization of the stats scratch.
        @pl.when(jnp.logical_and(ph == 0, t == 0))
        def _init():
            for l in range(num_layers):
                sum_refs[l][...] = jnp.zeros_like(sum_refs[l])
                sq_refs[l][...] = jnp.zeros_like(sq_refs[l])

        # Row-validity mask (only traced when node padding exists).
        if needs_mask:
            node = jax.lax.broadcasted_iota(jnp.int32, (k, tn, 1), 1)
            mask = (t * tn + node < n_valid).astype(jnp.float32).reshape(rows, 1)
        else:
            mask = None

        # (K, tn, C_in) block -> (K*tn, C_in) pixel rows (bf16 MXU operands).
        x = x_ref[...].reshape(rows, c_in_pad)

        def emit_layer(l, h_in):
            # 1x1 conv == channel matmul; bf16 operands, f32 accumulate.
            y = jnp.dot(h_in, w_refs[l][...], preferred_element_type=jnp.float32)
            last = l == num_layers - 1

            def acc_stats():
                # Padded rows are exactly zero here (zero-padded x / masked h),
                # so no mask is needed: zeros add nothing to sum / sumsq.
                sum_refs[l][...] += jnp.sum(y, axis=0, keepdims=True)
                sq_refs[l][...] += jnp.sum(y * y, axis=0, keepdims=True)

            def finalize():
                mean = sum_refs[l][...] * inv_r
                var = jnp.maximum(sq_refs[l][...] * inv_r - mean * mean, 0.0)
                s = g_refs[l][...] * jax.lax.rsqrt(var + BN_EPS)
                sh = b_refs[l][...] - mean * s
                if last:
                    # Last layer's folded affine is applied in the wrapper.
                    s_out_ref[...] = s[:, :c_last]
                    t_out_ref[...] = sh[:, :c_last]
                else:
                    scale_refs[l][...] = s
                    shift_refs[l][...] = sh

            if last:
                # The nesting guarantees ph == num_layers - 1 here.
                acc_stats()
                pl.when(t == n_tiles - 1)(finalize)
                # Neighbor extrema over the K contiguous (tn, C) slabs.
                # max_k relu(s*y+t) == relu(s*max_k y + t) for s >= 0 and
                # relu(s*min_k y + t) for s < 0, so tracking both extrema lets
                # the wrapper commute BN+ReLU with the K-max exactly.
                mx = y[0:tn, :]
                mn = y[0:tn, :]
                for kk in range(1, k):
                    slab = y[kk * tn:(kk + 1) * tn, :]
                    mx = jnp.maximum(mx, slab)
                    mn = jnp.minimum(mn, slab)
                mx_ref[...] = mx[:, :c_last]
                mn_ref[...] = mn[:, :c_last]
            else:
                pl.when(ph == l)(acc_stats)
                pl.when(jnp.logical_and(ph == l, t == n_tiles - 1))(finalize)

                def deeper():
                    # Only reached when ph > l, i.e. scale/shift are finalized.
                    h = jnp.maximum(y * scale_refs[l][...] + shift_refs[l][...], 0.0)
                    if mask is not None:
                        # Zero padded node rows once so the next (bias-free) conv
                        # contributes exact zeros to its BN statistics.
                        h = h * mask
                    emit_layer(l + 1, h.astype(jnp.bfloat16))

                pl.when(ph > l)(deeper)

        emit_layer(0, x)

    return kernel


# --------------------------------------------------------------------------- #
# Wrapper
# --------------------------------------------------------------------------- #
def _pad_params(params, c_in_pad, c_pads):
    """Zero-pad (w, gamma, beta) per layer to lane-dense channel widths."""
    out = []
    prev = c_in_pad
    for l, (w, g, b) in enumerate(params):
        c_in, c_out = w.shape
        cp = c_pads[l]
        wp = jnp.zeros((prev, cp), jnp.float32).at[:c_in, :c_out].set(w)
        gp = jnp.zeros((1, cp), jnp.float32).at[0, :c_out].set(g)
        bp = jnp.zeros((1, cp), jnp.float32).at[0, :c_out].set(b)
        out.append((wp.astype(jnp.bfloat16), gp, bp))
        prev = cp
    return out


def _prep_input(x, n_pad, c_in_pad):
    """(N, K, C) mailbox -> zero-padded, K-outer (K, N_pad, C_in_pad) bf16."""
    n, _, c = x.shape
    xk = jnp.transpose(x, (1, 0, 2))
    xk = jnp.pad(xk, ((0, 0), (0, n_pad - n), (0, c_in_pad - c)))
    return xk.astype(jnp.bfloat16)


def _pick_tiling():
    """Per-generation node tile + VMEM limit: 128 MiB parts (v5e/v6e) -> bigger
    tiles / 64 MiB limit; 64 MiB parts (v7x) -> conservative tile / 32 MiB."""
    try:
        vmem = int(getattr(pltpu.get_tpu_info(), "vmem_capacity_bytes", 64 << 20))
    except Exception:
        vmem = 64 << 20
    if vmem >= (96 << 20):
        return 512, 64 << 20
    return 256, 32 << 20


def grid_gcn_conv_forward(agg_feat, geo_feat, sem_params, geo_params,
                          node_tile=None, vmem_limit_bytes=None):
    """Fused Grid_GCN_Conv.forward.  Returns (2*N, C_last) == torch.cat([h, h_geo], 0)."""
    n, k, c_sem = agg_feat.shape
    n2, k2, c_geo = geo_feat.shape
    assert (n, k) == (n2, k2)
    assert len(sem_params) == len(geo_params)
    num_layers = len(sem_params)

    auto_tile, auto_vmem = _pick_tiling()
    if node_tile is None:
        node_tile = auto_tile
    if vmem_limit_bytes is None:
        vmem_limit_bytes = auto_vmem

    c_outs = [w.shape[1] for (w, _, _) in sem_params]
    c_last = c_outs[-1]
    c_pads = [_round_up(c, 128) for c in c_outs]     # lane-dense layer widths
    c_in_pad = _round_up(max(c_sem, c_geo), 8)       # shared first-layer C_in

    tn = min(node_tile, _round_up(n, 16))            # node tile (bf16 sublane aligned)
    n_pad = _round_up(n, tn)
    num_tiles = n_pad // tn

    x = jnp.stack([_prep_input(agg_feat, n_pad, c_in_pad),
                   _prep_input(geo_feat, n_pad, c_in_pad)], axis=0)

    sem_pp = _pad_params(sem_params, c_in_pad, c_pads)
    geo_pp = _pad_params(geo_params, c_in_pad, c_pads)

    flat_params = []
    in_specs = [pl.BlockSpec((None, k, tn, c_in_pad),
                             lambda br, ph, t: (br, 0, t, 0))]
    prev = c_in_pad
    for l in range(num_layers):
        w = jnp.stack([sem_pp[l][0], geo_pp[l][0]], axis=0)   # (2, prev, c_pad) bf16
        g = jnp.stack([sem_pp[l][1], geo_pp[l][1]], axis=0)   # (2, 1, c_pad) f32
        b = jnp.stack([sem_pp[l][2], geo_pp[l][2]], axis=0)
        flat_params += [w, g, b]
        in_specs += [
            pl.BlockSpec((None, prev, c_pads[l]), lambda br, ph, t: (br, 0, 0)),
            pl.BlockSpec((None, 1, c_pads[l]), lambda br, ph, t: (br, 0, 0)),
            pl.BlockSpec((None, 1, c_pads[l]), lambda br, ph, t: (br, 0, 0)),
        ]
        prev = c_pads[l]

    last_phase = num_layers - 1

    def tile_out_map(br, ph, t):
        # Only the last phase writes per-tile extrema; collapse to a fixed dummy
        # block in stats phases so stale VMEM is never written back to HBM.
        return (br, jnp.where(ph == last_phase, t, 0), 0)

    out_shapes = (
        jax.ShapeDtypeStruct((2, n_pad, c_last), jnp.float32),   # max_k pre-BN y
        jax.ShapeDtypeStruct((2, n_pad, c_last), jnp.float32),   # min_k pre-BN y
        jax.ShapeDtypeStruct((2, 1, c_last), jnp.float32),       # folded BN scale
        jax.ShapeDtypeStruct((2, 1, c_last), jnp.float32),       # folded BN shift
    )
    out_specs = (
        pl.BlockSpec((None, tn, c_last), tile_out_map),
        pl.BlockSpec((None, tn, c_last), tile_out_map),
        pl.BlockSpec((None, 1, c_last), lambda br, ph, t: (br, 0, 0)),
        pl.BlockSpec((None, 1, c_last), lambda br, ph, t: (br, 0, 0)),
    )

    scratch = []
    for l in range(num_layers):
        scratch += [pltpu.VMEM((1, c_pads[l]), jnp.float32)] * 2      # sum, sumsq
    for l in range(num_layers - 1):
        scratch += [pltpu.VMEM((1, c_pads[l]), jnp.float32)] * 2      # scale, shift

    kernel = make_kernel(num_layers, k, tn, n, n_pad, c_in_pad, c_last)

    mx, mn, s_out, t_out = pl.pallas_call(
        kernel,
        out_shape=out_shapes,
        grid_spec=pltpu.PrefetchScalarGridSpec(
            num_scalar_prefetch=0,
            grid=(2, num_layers, num_tiles),    # (branch, BN phase, row tile)
            in_specs=in_specs,
            out_specs=out_specs,
            scratch_shapes=scratch),
        compiler_params=pltpu.CompilerParams(
            # Branches are fully independent (per-core scratch re-init at
            # ph==0,t==0) -> safe to shard across v7x's 2 TensorCores.
            # Phase/tile MUST stay serialized: global BN batch stats.
            dimension_semantics=("parallel", "arbitrary", "arbitrary"),
            vmem_limit_bytes=vmem_limit_bytes),
    )(x, *flat_params)

    # Tiny elementwise finalize (plain XLA): commute last BN+ReLU with the K-max.
    sel = jnp.where(s_out >= 0.0, mx, mn)
    h = jnp.maximum(sel * s_out + t_out, 0.0)
    return h[:, :n, :].reshape(2 * n, c_last)


# --------------------------------------------------------------------------- #
# Params + pure-JAX reference
# --------------------------------------------------------------------------- #
def init_branch_params(key, channel_sizes):
    """Synthetic (conv weight, BN gamma, BN beta) for Conv2d(c_{i-1}, c_i, 1) + BatchNorm2d.
    Conv bias omitted: with training-mode BN right after the conv, a per-channel
    bias is exactly cancelled by the batch-mean subtraction."""
    params = []
    for i in range(1, len(channel_sizes)):
        c_in, c_out = channel_sizes[i - 1], channel_sizes[i]
        key, kw, kg, kb = jax.random.split(key, 4)
        w = jax.random.normal(kw, (c_in, c_out), jnp.float32) * 0.1
        g = 1.0 + 0.1 * jax.random.normal(kg, (c_out,), jnp.float32)
        b = 0.1 * jax.random.normal(kb, (c_out,), jnp.float32)
        params.append((w, g, b))
    return params


def _reference_branch(x, params):
    n, k, c = x.shape
    h = x.reshape(n * k, c)
    for (w, g, b) in params:
        y = h @ w
        mean = jnp.mean(y, axis=0, keepdims=True)
        var = jnp.mean(jnp.square(y - mean), axis=0, keepdims=True)
        h = jnp.maximum((y - mean) * jax.lax.rsqrt(var + BN_EPS) * g + b, 0.0)
    return jnp.max(h.reshape(n, k, h.shape[-1]), axis=1)


# --------------------------------------------------------------------------- #
# Demo
# --------------------------------------------------------------------------- #
if __name__ == "__main__":
    # sizes = [4, 16, 32]; batch B = 2, M = 8 nodes/batch, K = 8 neighbor messages
    sizes = [4, 16, 32]
    B, M, K = 2, 8, 8
    N = B * M

    key = jax.random.PRNGKey(0)
    k_agg, k_geo, k_ps, k_pg = jax.random.split(key, 4)
    agg_feat = jax.random.normal(k_agg, (N, K, sizes[0]), jnp.float32)  # mailbox['agg_feat']
    geo_feat = jax.random.normal(k_geo, (N, K, 6), jnp.float32)         # mailbox['geo_feat']

    sem_params = init_branch_params(k_ps, sizes)                   # conv / bn
    geo_params = init_branch_params(k_pg, [6] + list(sizes[1:]))   # conv_geo / bn_geo

    new_feat = grid_gcn_conv_forward(agg_feat, geo_feat, sem_params, geo_params)
    new_feat = jax.block_until_ready(new_feat)

    assert new_feat.shape == (2 * N, sizes[-1]), new_feat.shape
    assert bool(jnp.all(jnp.isfinite(new_feat)))

    # Loose tolerance: kernel uses bf16 MXU operands (f32 accumulate).
    ref = jnp.concatenate([_reference_branch(agg_feat, sem_params),
                           _reference_branch(geo_feat, geo_params)], axis=0)
    max_err = float(jnp.max(jnp.abs(new_feat - ref)))
    assert max_err < 0.1, f"max abs error vs reference: {max_err}"

    print("KERNEL_OK")
</pallas_src>

<mosaic_0001>
module attributes {stable_mosaic.version = 11 : i64} {
  func.func @kernel(%arg0: i32, %arg1: i32, %arg2: i32, %arg3: memref<1x8x16x8xbf16, #tpu.memory_space<vmem>>, %arg4: memref<1x8x128xbf16, #tpu.memory_space<vmem>>, %arg5: memref<1x1x128xf32, #tpu.memory_space<vmem>>, %arg6: memref<1x1x128xf32, #tpu.memory_space<vmem>>, %arg7: memref<1x128x128xbf16, #tpu.memory_space<vmem>>, %arg8: memref<1x1x128xf32, #tpu.memory_space<vmem>>, %arg9: memref<1x1x128xf32, #tpu.memory_space<vmem>>, %arg10: memref<1x16x32xf32, #tpu.memory_space<vmem>>, %arg11: memref<1x16x32xf32, #tpu.memory_space<vmem>>, %arg12: memref<1x1x32xf32, #tpu.memory_space<vmem>>, %arg13: memref<1x1x32xf32, #tpu.memory_space<vmem>>, %arg14: memref<1x128xf32, #tpu.memory_space<vmem>>, %arg15: memref<1x128xf32, #tpu.memory_space<vmem>>, %arg16: memref<1x128xf32, #tpu.memory_space<vmem>>, %arg17: memref<1x128xf32, #tpu.memory_space<vmem>>, %arg18: memref<1x128xf32, #tpu.memory_space<vmem>>, %arg19: memref<1x128xf32, #tpu.memory_space<vmem>>) attributes {dimension_semantics = [#tpu.dimension_semantics<parallel>, #tpu.dimension_semantics<arbitrary>, #tpu.dimension_semantics<arbitrary>], iteration_bounds = array<i64: 2, 2, 1>, scalar_prefetch = 0 : i64, scratch_operands = 6 : i64, tpu.core_type = #tpu.core_type<tc>, window_params = [{transform_indices = @transform_0, window_bounds = array<i64: 1, 8, 16, 8>}, {transform_indices = @transform_1, window_bounds = array<i64: 1, 8, 128>}, {transform_indices = @transform_2, window_bounds = array<i64: 1, 1, 128>}, {transform_indices = @transform_3, window_bounds = array<i64: 1, 1, 128>}, {transform_indices = @transform_4, window_bounds = array<i64: 1, 128, 128>}, {transform_indices = @transform_5, window_bounds = array<i64: 1, 1, 128>}, {transform_indices = @transform_6, window_bounds = array<i64: 1, 1, 128>}, {transform_indices = @transform_7, window_bounds = array<i64: 1, 16, 32>}, {transform_indices = @transform_8, window_bounds = array<i64: 1, 16, 32>}, {transform_indices = @transform_9, window_bounds = array<i64: 1, 1, 32>}, {transform_indices = @transform_10, window_bounds = array<i64: 1, 1, 32>}]} {
    %c0_i32 = arith.constant 0 : i32
    %0 = arith.cmpi eq, %arg1, %c0_i32 : i32
    %c0_i32_0 = arith.constant 0 : i32
    %1 = arith.cmpi eq, %arg2, %c0_i32_0 : i32
    %2 = arith.andi %0, %1 : i1
    %3 = arith.extui %2 : i1 to i32
    %c0_i32_1 = arith.constant 0 : i32
    %4 = arith.cmpi ne, %3, %c0_i32_1 : i32
    scf.if %4 {
      %cst_15 = arith.constant 0.000000e+00 : f32
      %22 = vector.broadcast %cst_15 : f32 to vector<1x128xf32>
      %c0_16 = arith.constant 0 : index
      %c0_17 = arith.constant 0 : index
      %23 = vector.load %arg14[%c0_16, %c0_17] : memref<1x128xf32, #tpu.memory_space<vmem>>, vector<1x128xf32>
      tpu.vector_store %arg14[%c0_16, %c0_17], %22 {strides = array<i32>} : memref<1x128xf32, #tpu.memory_space<vmem>>, vector<1x128xf32>,
      %cst_18 = arith.constant 0.000000e+00 : f32
      %24 = vector.broadcast %cst_18 : f32 to vector<1x128xf32>
      %c0_19 = arith.constant 0 : index
      %c0_20 = arith.constant 0 : index
      %25 = vector.load %arg15[%c0_19, %c0_20] : memref<1x128xf32, #tpu.memory_space<vmem>>, vector<1x128xf32>
      tpu.vector_store %arg15[%c0_19, %c0_20], %24 {strides = array<i32>} : memref<1x128xf32, #tpu.memory_space<vmem>>, vector<1x128xf32>,
      %cst_21 = arith.constant 0.000000e+00 : f32
      %26 = vector.broadcast %cst_21 : f32 to vector<1x128xf32>
      %c0_22 = arith.constant 0 : index
      %c0_23 = arith.constant 0 : index
      %27 = vector.load %arg16[%c0_22, %c0_23] : memref<1x128xf32, #tpu.memory_space<vmem>>, vector<1x128xf32>
      tpu.vector_store %arg16[%c0_22, %c0_23], %26 {strides = array<i32>} : memref<1x128xf32, #tpu.memory_space<vmem>>, vector<1x128xf32>,
      %cst_24 = arith.constant 0.000000e+00 : f32
      %28 = vector.broadcast %cst_24 : f32 to vector<1x128xf32>
      %c0_25 = arith.constant 0 : index
      %c0_26 = arith.constant 0 : index
      %29 = vector.load %arg17[%c0_25, %c0_26] : memref<1x128xf32, #tpu.memory_space<vmem>>, vector<1x128xf32>
      tpu.vector_store %arg17[%c0_25, %c0_26], %28 {strides = array<i32>} : memref<1x128xf32, #tpu.memory_space<vmem>>, vector<1x128xf32>,
    } else {
    }
    %c0 = arith.constant 0 : index
    %c0_2 = arith.constant 0 : index
    %c0_3 = arith.constant 0 : index
    %c0_4 = arith.constant 0 : index
    %5 = vector.load %arg3[%c0, %c0_2, %c0_3, %c0_4] : memref<1x8x16x8xbf16, #tpu.memory_space<vmem>>, vector<1x8x16x8xbf16>
    %6 = vector.shape_cast %5 : vector<1x8x16x8xbf16> to vector<8x16x8xbf16>
    %7 = vector.shape_cast %6 : vector<8x16x8xbf16> to vector<128x8xbf16>
    %c0_5 = arith.constant 0 : index
    %c0_6 = arith.constant 0 : index
    %c0_7 = arith.constant 0 : index
    %8 = vector.load %arg4[%c0_5, %c0_6, %c0_7] : memref<1x8x128xbf16, #tpu.memory_space<vmem>>, vector<1x8x128xbf16>
    %9 = vector.shape_cast %8 : vector<1x8x128xbf16> to vector<8x128xbf16>
    %cst = arith.constant dense<0.000000e+00> : vector<128x128xf32>
    %10 = tpu.matmul %7, %9, %cst {dimension_numbers = #tpu.dot_dimension_numbers<[1], [0], [0], [1], [0, 0, 1, 1], [], []>} : vector<128x8xbf16>, vector<8x128xbf16>, vector<128x128xf32> -> vector<128x128xf32>
    %c0_i32_8 = arith.constant 0 : i32
    %11 = arith.cmpi eq, %arg1, %c0_i32_8 : i32
    %12 = arith.extui %11 : i1 to i32
    %c0_i32_9 = arith.constant 0 : i32
    %13 = arith.cmpi ne, %12, %c0_i32_9 : i32
    scf.if %13 {
      %c0_15 = arith.constant 0 : index
      %c0_16 = arith.constant 0 : index
      %22 = vector.load %arg14[%c0_15, %c0_16] : memref<1x128xf32, #tpu.memory_space<vmem>>, vector<1x128xf32>
      %cst_17 = arith.constant dense<0.000000e+00> : vector<128xf32>
      %23 = vector.multi_reduction <add>, %10, %cst_17 [0] : vector<128x128xf32> to vector<128xf32>
      %24 = vector.shape_cast %23 : vector<128xf32> to vector<1x128xf32>
      %25 = arith.addf %22, %24 : vector<1x128xf32>
      %c0_18 = arith.constant 0 : index
      %c0_19 = arith.constant 0 : index
      %26 = vector.load %arg14[%c0_18, %c0_19] : memref<1x128xf32, #tpu.memory_space<vmem>>, vector<1x128xf32>
      tpu.vector_store %arg14[%c0_18, %c0_19], %25 {strides = array<i32>} : memref<1x128xf32, #tpu.memory_space<vmem>>, vector<1x128xf32>,
      %c0_20 = arith.constant 0 : index
      %c0_21 = arith.constant 0 : index
      %27 = vector.load %arg15[%c0_20, %c0_21] : memref<1x128xf32, #tpu.memory_space<vmem>>, vector<1x128xf32>
      %28 = arith.mulf %10, %10 : vector<128x128xf32>
      %cst_22 = arith.constant dense<0.000000e+00> : vector<128xf32>
      %29 = vector.multi_reduction <add>, %28, %cst_22 [0] : vector<128x128xf32> to vector<128xf32>
      %30 = vector.shape_cast %29 : vector<128xf32> to vector<1x128xf32>
      %31 = arith.addf %27, %30 : vector<1x128xf32>
      %c0_23 = arith.constant 0 : index
      %c0_24 = arith.constant 0 : index
      %32 = vector.load %arg15[%c0_23, %c0_24] : memref<1x128xf32, #tpu.memory_space<vmem>>, vector<1x128xf32>
      tpu.vector_store %arg15[%c0_23, %c0_24], %31 {strides = array<i32>} : memref<1x128xf32, #tpu.memory_space<vmem>>, vector<1x128xf32>,
    } else {
    }
    %c0_i32_10 = arith.constant 0 : i32
    %14 = arith.cmpi eq, %arg1, %c0_i32_10 : i32
    %c0_i32_11 = arith.constant 0 : i32
    %15 = arith.cmpi eq, %arg2, %c0_i32_11 : i32
    %16 = arith.andi %14, %15 : i1
    %17 = arith.extui %16 : i1 to i32
    %c0_i32_12 = arith.constant 0 : i32
    %18 = arith.cmpi ne, %17, %c0_i32_12 : i32
    scf.if %18 {
      %c0_15 = arith.constant 0 : index
      %c0_16 = arith.constant 0 : index
      %22 = vector.load %arg14[%c0_15, %c0_16] : memref<1x128xf32, #tpu.memory_space<vmem>>, vector<1x128xf32>
      %cst_17 = arith.constant 7.812500e-03 : f32
      %23 = vector.broadcast %cst_17 : f32 to vector<1x128xf32>
      %24 = arith.mulf %22, %23 : vector<1x128xf32>
      %c0_18 = arith.constant 0 : index
      %c0_19 = arith.constant 0 : index
      %25 = vector.load %arg15[%c0_18, %c0_19] : memref<1x128xf32, #tpu.memory_space<vmem>>, vector<1x128xf32>
      %cst_20 = arith.constant 7.812500e-03 : f32
      %26 = vector.broadcast %cst_20 : f32 to vector<1x128xf32>
      %27 = arith.mulf %25, %26 : vector<1x128xf32>
      %28 = arith.mulf %24, %24 : vector<1x128xf32>
      %29 = arith.subf %27, %28 : vector<1x128xf32>
      %cst_21 = arith.constant 0.000000e+00 : f32
      %30 = vector.broadcast %cst_21 : f32 to vector<1x128xf32>
      %31 = arith.maximumf %29, %30 : vector<1x128xf32>
      %c0_22 = arith.constant 0 : index
      %c0_23 = arith.constant 0 : index
      %c0_24 = arith.constant 0 : index
      %32 = vector.load %arg5[%c0_22, %c0_23, %c0_24] : memref<1x1x128xf32, #tpu.memory_space<vmem>>, vector<1x1x128xf32>
      %33 = vector.shape_cast %32 : vector<1x1x128xf32> to vector<1x128xf32>
      %cst_25 = arith.constant 9.99999974E-6 : f32
      %34 = vector.broadcast %cst_25 : f32 to vector<1x128xf32>
      %35 = arith.addf %31, %34 : vector<1x128xf32>
      %36 = math.rsqrt %35 : vector<1x128xf32>
      %37 = arith.mulf %33, %36 : vector<1x128xf32>
      %c0_26 = arith.constant 0 : index
      %c0_27 = arith.constant 0 : index
      %c0_28 = arith.constant 0 : index
      %38 = vector.load %arg6[%c0_26, %c0_27, %c0_28] : memref<1x1x128xf32, #tpu.memory_space<vmem>>, vector<1x1x128xf32>
      %39 = vector.shape_cast %38 : vector<1x1x128xf32> to vector<1x128xf32>
      %40 = arith.mulf %24, %37 : vector<1x128xf32>
      %41 = arith.subf %39, %40 : vector<1x128xf32>
      %c0_29 = arith.constant 0 : index
      %c0_30 = arith.constant 0 : index
      %42 = vector.load %arg18[%c0_29, %c0_30] : memref<1x128xf32, #tpu.memory_space<vmem>>, vector<1x128xf32>
      tpu.vector_store %arg18[%c0_29, %c0_30], %37 {strides = array<i32>} : memref<1x128xf32, #tpu.memory_space<vmem>>, vector<1x128xf32>,
      %c0_31 = arith.constant 0 : index
      %c0_32 = arith.constant 0 : index
      %43 = vector.load %arg19[%c0_31, %c0_32] : memref<1x128xf32, #tpu.memory_space<vmem>>, vector<1x128xf32>
      tpu.vector_store %arg19[%c0_31, %c0_32], %41 {strides = array<i32>} : memref<1x128xf32, #tpu.memory_space<vmem>>, vector<1x128xf32>,
    } else {
    }
    %c0_i32_13 = arith.constant 0 : i32
    %19 = arith.cmpi sgt, %arg1, %c0_i32_13 : i32
    %20 = arith.extui %19 : i1 to i32
    %c0_i32_14 = arith.constant 0 : i32
    %21 = arith.cmpi ne, %20, %c0_i32_14 : i32
    scf.if %21 {
      %c0_15 = arith.constant 0 : index
      %c0_16 = arith.constant 0 : index
      %22 = vector.load %arg18[%c0_15, %c0_16] : memref<1x128xf32, #tpu.memory_space<vmem>>, vector<1x128xf32>
      %23 = vector.broadcast %22 : vector<1x128xf32> to vector<128x128xf32>
      %24 = arith.mulf %10, %23 : vector<128x128xf32>
      %c0_17 = arith.constant 0 : index
      %c0_18 = arith.constant 0 : index
      %25 = vector.load %arg19[%c0_17, %c0_18] : memref<1x128xf32, #tpu.memory_space<vmem>>, vector<1x128xf32>
      %26 = vector.broadcast %25 : vector<1x128xf32> to vector<128x128xf32>
      %27 = arith.addf %24, %26 : vector<128x128xf32>
      %cst_19 = arith.constant 0.000000e+00 : f32
      %28 = vector.broadcast %cst_19 : f32 to vector<128x128xf32>
      %29 = arith.maximumf %27, %28 : vector<128x128xf32>
      %30 = arith.truncf %29 : vector<128x128xf32> to vector<128x128xbf16>
      %c0_20 = arith.constant 0 : index
      %c0_21 = arith.constant 0 : index
      %c0_22 = arith.constant 0 : index
      %31 = vector.load %arg7[%c0_20, %c0_21, %c0_22] : memref<1x128x128xbf16, #tpu.memory_space<vmem>>, vector<1x128x128xbf16>
      %32 = vector.shape_cast %31 : vector<1x128x128xbf16> to vector<128x128xbf16>
      %cst_23 = arith.constant dense<0.000000e+00> : vector<128x128xf32>
      %33 = tpu.matmul %30, %32, %cst_23 {dimension_numbers = #tpu.dot_dimension_numbers<[1], [0], [0], [1], [0, 0, 1, 1], [], []>} : vector<128x128xbf16>, vector<128x128xbf16>, vector<128x128xf32> -> vector<128x128xf32>
      %c0_24 = arith.constant 0 : index
      %c0_25 = arith.constant 0 : index
      %34 = vector.load %arg16[%c0_24, %c0_25] : memref<1x128xf32, #tpu.memory_space<vmem>>, vector<1x128xf32>
      %cst_26 = arith.constant dense<0.000000e+00> : vector<128xf32>
      %35 = vector.multi_reduction <add>, %33, %cst_26 [0] : vector<128x128xf32> to vector<128xf32>
      %36 = vector.shape_cast %35 : vector<128xf32> to vector<1x128xf32>
      %37 = arith.addf %34, %36 : vector<1x128xf32>
      %c0_27 = arith.constant 0 : index
      %c0_28 = arith.constant 0 : index
      %38 = vector.load %arg16[%c0_27, %c0_28] : memref<1x128xf32, #tpu.memory_space<vmem>>, vector<1x128xf32>
      tpu.vector_store %arg16[%c0_27, %c0_28], %37 {strides = array<i32>} : memref<1x128xf32, #tpu.memory_space<vmem>>, vector<1x128xf32>,
      %c0_29 = arith.constant 0 : index
      %c0_30 = arith.constant 0 : index
      %39 = vector.load %arg17[%c0_29, %c0_30] : memref<1x128xf32, #tpu.memory_space<vmem>>, vector<1x128xf32>
      %40 = arith.mulf %33, %33 : vector<128x128xf32>
      %cst_31 = arith.constant dense<0.000000e+00> : vector<128xf32>
      %41 = vector.multi_reduction <add>, %40, %cst_31 [0] : vector<128x128xf32> to vector<128xf32>
      %42 = vector.shape_cast %41 : vector<128xf32> to vector<1x128xf32>
      %43 = arith.addf %39, %42 : vector<1x128xf32>
      %c0_32 = arith.constant 0 : index
      %c0_33 = arith.constant 0 : index
      %44 = vector.load %arg17[%c0_32, %c0_33] : memref<1x128xf32, #tpu.memory_space<vmem>>, vector<1x128xf32>
      tpu.vector_store %arg17[%c0_32, %c0_33], %43 {strides = array<i32>} : memref<1x128xf32, #tpu.memory_space<vmem>>, vector<1x128xf32>,
      %c0_i32_34 = arith.constant 0 : i32
      %45 = arith.cmpi eq, %arg2, %c0_i32_34 : i32
      %46 = arith.extui %45 : i1 to i32
      %c0_i32_35 = arith.constant 0 : i32
      %47 = arith.cmpi ne, %46, %c0_i32_35 : i32
      scf.if %47 {
        %c0_42 = arith.constant 0 : index
        %c0_43 = arith.constant 0 : index
        %79 = vector.load %arg16[%c0_42, %c0_43] : memref<1x128xf32, #tpu.memory_space<vmem>>, vector<1x128xf32>
        %cst_44 = arith.constant 7.812500e-03 : f32
        %80 = vector.broadcast %cst_44 : f32 to vector<1x128xf32>
        %81 = arith.mulf %79, %80 : vector<1x128xf32>
        %c0_45 = arith.constant 0 : index
        %c0_46 = arith.constant 0 : index
        %82 = vector.load %arg17[%c0_45, %c0_46] : memref<1x128xf32, #tpu.memory_space<vmem>>, vector<1x128xf32>
        %cst_47 = arith.constant 7.812500e-03 : f32
        %83 = vector.broadcast %cst_47 : f32 to vector<1x128xf32>
        %84 = arith.mulf %82, %83 : vector<1x128xf32>
        %85 = arith.mulf %81, %81 : vector<1x128xf32>
        %86 = arith.subf %84, %85 : vector<1x128xf32>
        %cst_48 = arith.constant 0.000000e+00 : f32
        %87 = vector.broadcast %cst_48 : f32 to vector<1x128xf32>
        %88 = arith.maximumf %86, %87 : vector<1x128xf32>
        %c0_49 = arith.constant 0 : index
        %c0_50 = arith.constant 0 : index
        %c0_51 = arith.constant 0 : index
        %89 = vector.load %arg8[%c0_49, %c0_50, %c0_51] : memref<1x1x128xf32, #tpu.memory_space<vmem>>, vector<1x1x128xf32>
        %90 = vector.shape_cast %89 : vector<1x1x128xf32> to vector<1x128xf32>
        %cst_52 = arith.constant 9.99999974E-6 : f32
        %91 = vector.broadcast %cst_52 : f32 to vector<1x128xf32>
        %92 = arith.addf %88, %91 : vector<1x128xf32>
        %93 = math.rsqrt %92 : vector<1x128xf32>
        %94 = arith.mulf %90, %93 : vector<1x128xf32>
        %c0_53 = arith.constant 0 : index
        %c0_54 = arith.constant 0 : index
        %c0_55 = arith.constant 0 : index
        %95 = vector.load %arg9[%c0_53, %c0_54, %c0_55] : memref<1x1x128xf32, #tpu.memory_space<vmem>>, vector<1x1x128xf32>
        %96 = vector.shape_cast %95 : vector<1x1x128xf32> to vector<1x128xf32>
        %97 = arith.mulf %81, %94 : vector<1x128xf32>
        %98 = arith.subf %96, %97 : vector<1x128xf32>
        %99 = vector.extract_strided_slice %94 {offsets = [0, 0], sizes = [1, 32], strides = [1, 1]} : vector<1x128xf32> to vector<1x32xf32>
        %c0_56 = arith.constant 0 : index
        %c0_57 = arith.constant 0 : index
        %c0_58 = arith.constant 0 : index
        %100 = vector.load %arg12[%c0_56, %c0_57, %c0_58] : memref<1x1x32xf32, #tpu.memory_space<vmem>>, vector<1x1x32xf32>
        %101 = vector.shape_cast %100 : vector<1x1x32xf32> to vector<1x32xf32>
        %102 = vector.shape_cast %99 : vector<1x32xf32> to vector<1x1x32xf32>
        tpu.vector_store %arg12[%c0_56, %c0_57, %c0_58], %102 {strides = array<i32>} : memref<1x1x32xf32, #tpu.memory_space<vmem>>, vector<1x1x32xf32>,
        %103 = vector.extract_strided_slice %98 {offsets = [0, 0], sizes = [1, 32], strides = [1, 1]} : vector<1x128xf32> to vector<1x32xf32>
        %c0_59 = arith.constant 0 : index
        %c0_60 = arith.constant 0 : index
        %c0_61 = arith.constant 0 : index
        %104 = vector.load %arg13[%c0_59, %c0_60, %c0_61] : memref<1x1x32xf32, #tpu.memory_space<vmem>>, vector<1x1x32xf32>
        %105 = vector.shape_cast %104 : vector<1x1x32xf32> to vector<1x32xf32>
        %106 = vector.shape_cast %103 : vector<1x32xf32> to vector<1x1x32xf32>
        tpu.vector_store %arg13[%c0_59, %c0_60, %c0_61], %106 {strides = array<i32>} : memref<1x1x32xf32, #tpu.memory_space<vmem>>, vector<1x1x32xf32>,
      } else {
      }
      %48 = vector.extract_strided_slice %33 {offsets = [0, 0], sizes = [16, 128], strides = [1, 1]} : vector<128x128xf32> to vector<16x128xf32>
      %49 = vector.extract_strided_slice %33 {offsets = [0, 0], sizes = [16, 128], strides = [1, 1]} : vector<128x128xf32> to vector<16x128xf32>
      %50 = vector.extract_strided_slice %33 {offsets = [16, 0], sizes = [16, 128], strides = [1, 1]} : vector<128x128xf32> to vector<16x128xf32>
      %51 = arith.maximumf %48, %50 : vector<16x128xf32>
      %52 = arith.minimumf %49, %50 : vector<16x128xf32>
      %53 = vector.extract_strided_slice %33 {offsets = [32, 0], sizes = [16, 128], strides = [1, 1]} : vector<128x128xf32> to vector<16x128xf32>
      %54 = arith.maximumf %51, %53 : vector<16x128xf32>
      %55 = arith.minimumf %52, %53 : vector<16x128xf32>
      %56 = vector.extract_strided_slice %33 {offsets = [48, 0], sizes = [16, 128], strides = [1, 1]} : vector<128x128xf32> to vector<16x128xf32>
      %57 = arith.maximumf %54, %56 : vector<16x128xf32>
      %58 = arith.minimumf %55, %56 : vector<16x128xf32>
      %59 = vector.extract_strided_slice %33 {offsets = [64, 0], sizes = [16, 128], strides = [1, 1]} : vector<128x128xf32> to vector<16x128xf32>
      %60 = arith.maximumf %57, %59 : vector<16x128xf32>
      %61 = arith.minimumf %58, %59 : vector<16x128xf32>
      %62 = vector.extract_strided_slice %33 {offsets = [80, 0], sizes = [16, 128], strides = [1, 1]} : vector<128x128xf32> to vector<16x128xf32>
      %63 = arith.maximumf %60, %62 : vector<16x128xf32>
      %64 = arith.minimumf %61, %62 : vector<16x128xf32>
      %65 = vector.extract_strided_slice %33 {offsets = [96, 0], sizes = [16, 128], strides = [1, 1]} : vector<128x128xf32> to vector<16x128xf32>
      %66 = arith.maximumf %63, %65 : vector<16x128xf32>
      %67 = arith.minimumf %64, %65 : vector<16x128xf32>
      %68 = vector.extract_strided_slice %33 {offsets = [112, 0], sizes = [16, 128], strides = [1, 1]} : vector<128x128xf32> to vector<16x128xf32>
      %69 = arith.maximumf %66, %68 : vector<16x128xf32>
      %70 = arith.minimumf %67, %68 : vector<16x128xf32>
      %71 = vector.extract_strided_slice %69 {offsets = [0, 0], sizes = [16, 32], strides = [1, 1]} : vector<16x128xf32> to vector<16x32xf32>
      %c0_36 = arith.constant 0 : index
      %c0_37 = arith.constant 0 : index
      %c0_38 = arith.constant 0 : index
      %72 = vector.load %arg10[%c0_36, %c0_37, %c0_38] : memref<1x16x32xf32, #tpu.memory_space<vmem>>, vector<1x16x32xf32>
      %73 = vector.shape_cast %72 : vector<1x16x32xf32> to vector<16x32xf32>
      %74 = vector.shape_cast %71 : vector<16x32xf32> to vector<1x16x32xf32>
      tpu.vector_store %arg10[%c0_36, %c0_37, %c0_38], %74 {strides = array<i32>} : memref<1x16x32xf32, #tpu.memory_space<vmem>>, vector<1x16x32xf32>,
      %75 = vector.extract_strided_slice %70 {offsets = [0, 0], sizes = [16, 32], strides = [1, 1]} : vector<16x128xf32> to vector<16x32xf32>
      %c0_39 = arith.constant 0 : index
      %c0_40 = arith.constant 0 : index
      %c0_41 = arith.constant 0 : index
      %76 = vector.load %arg11[%c0_39, %c0_40, %c0_41] : memref<1x16x32xf32, #tpu.memory_space<vmem>>, vector<1x16x32xf32>
      %77 = vector.shape_cast %76 : vector<1x16x32xf32> to vector<16x32xf32>
      %78 = vector.shape_cast %75 : vector<16x32xf32> to vector<1x16x32xf32>
      tpu.vector_store %arg11[%c0_39, %c0_40, %c0_41], %78 {strides = array<i32>} : memref<1x16x32xf32, #tpu.memory_space<vmem>>, vector<1x16x32xf32>,
    } else {
    }
    return
  }
  func.func @transform_0(%arg0: i32, %arg1: i32, %arg2: i32) -> (i32, i32, i32, i32) {
    %c0_i32 = arith.constant 0 : i32
    %c0_i32_0 = arith.constant 0 : i32
    %c0_i32_1 = arith.constant 0 : i32
    return %arg0, %c0_i32, %arg2, %c0_i32_0 : i32, i32, i32, i32
  }
  func.func @transform_1(%arg0: i32, %arg1: i32, %arg2: i32) -> (i32, i32, i32) {
    %c0_i32 = arith.constant 0 : i32
    %c0_i32_0 = arith.constant 0 : i32
    %c0_i32_1 = arith.constant 0 : i32
    return %arg0, %c0_i32, %c0_i32_0 : i32, i32, i32
  }
  func.func @transform_2(%arg0: i32, %arg1: i32, %arg2: i32) -> (i32, i32, i32) {
    %c0_i32 = arith.constant 0 : i32
    %c0_i32_0 = arith.constant 0 : i32
    %c0_i32_1 = arith.constant 0 : i32
    return %arg0, %c0_i32, %c0_i32_0 : i32, i32, i32
  }
  func.func @transform_3(%arg0: i32, %arg1: i32, %arg2: i32) -> (i32, i32, i32) {
    %c0_i32 = arith.constant 0 : i32
    %c0_i32_0 = arith.constant 0 : i32
    %c0_i32_1 = arith.constant 0 : i32
    return %arg0, %c0_i32, %c0_i32_0 : i32, i32, i32
  }
  func.func @transform_4(%arg0: i32, %arg1: i32, %arg2: i32) -> (i32, i32, i32) {
    %c0_i32 = arith.constant 0 : i32
    %c0_i32_0 = arith.constant 0 : i32
    %c0_i32_1 = arith.constant 0 : i32
    return %arg0, %c0_i32, %c0_i32_0 : i32, i32, i32
  }
  func.func @transform_5(%arg0: i32, %arg1: i32, %arg2: i32) -> (i32, i32, i32) {
    %c0_i32 = arith.constant 0 : i32
    %c0_i32_0 = arith.constant 0 : i32
    %c0_i32_1 = arith.constant 0 : i32
    return %arg0, %c0_i32, %c0_i32_0 : i32, i32, i32
  }
  func.func @transform_6(%arg0: i32, %arg1: i32, %arg2: i32) -> (i32, i32, i32) {
    %c0_i32 = arith.constant 0 : i32
    %c0_i32_0 = arith.constant 0 : i32
    %c0_i32_1 = arith.constant 0 : i32
    return %arg0, %c0_i32, %c0_i32_0 : i32, i32, i32
  }
  func.func @transform_7(%arg0: i32, %arg1: i32, %arg2: i32) -> (i32, i32, i32) {
    %c1_i32 = arith.constant 1 : i32
    %0 = arith.cmpi eq, %arg1, %c1_i32 : i32
    %c0_i32 = arith.constant 0 : i32
    %1 = arith.select %0, %arg2, %c0_i32 : i32
    %c0_i32_0 = arith.constant 0 : i32
    %c0_i32_1 = arith.constant 0 : i32
    return %arg0, %1, %c0_i32_0 : i32, i32, i32
  }
  func.func @transform_8(%arg0: i32, %arg1: i32, %arg2: i32) -> (i32, i32, i32) {
    %c1_i32 = arith.constant 1 : i32
    %0 = arith.cmpi eq, %arg1, %c1_i32 : i32
    %c0_i32 = arith.constant 0 : i32
    %1 = arith.select %0, %arg2, %c0_i32 : i32
    %c0_i32_0 = arith.constant 0 : i32
    %c0_i32_1 = arith.constant 0 : i32
    return %arg0, %1, %c0_i32_0 : i32, i32, i32
  }
  func.func @transform_9(%arg0: i32, %arg1: i32, %arg2: i32) -> (i32, i32, i32) {
    %c0_i32 = arith.constant 0 : i32
    %c0_i32_0 = arith.constant 0 : i32
    %c0_i32_1 = arith.constant 0 : i32
    return %arg0, %c0_i32, %c0_i32_0 : i32, i32, i32
  }
  func.func @transform_10(%arg0: i32, %arg1: i32, %arg2: i32) -> (i32, i32, i32) {
    %c0_i32 = arith.constant 0 : i32
    %c0_i32_0 = arith.constant 0 : i32
    %c0_i32_1 = arith.constant 0 : i32
    return %arg0, %c0_i32, %c0_i32_0 : i32, i32, i32
  }
}

</mosaic_0001>

<llo_original>
// kernel: tpu_custom_call.1
$region0: #{tpu_custom_call.1}
  #allocation0 [shape = 'u32[]', space=smem, size = 0x4, offset = 0x4, fixed_abs, tag = 'smem constant byte address 0x4 - core index']
  #allocation1 [shape = 'u32[144,128]{1,0:T(1,128)}', space=vmem, size = 0x12000, scoped, tag = 'internal scratch']
  #allocation2 [shape = 'f32[1,128]{1,0:T(1,128)}', space=vmem, size = 0x200, scoped, tag = 'scratch operand']
  #allocation3 [shape = 'f32[1,128]{1,0:T(1,128)}', space=vmem, size = 0x200, scoped, tag = 'scratch operand']
  #allocation4 [shape = 'f32[1,128]{1,0:T(1,128)}', space=vmem, size = 0x200, scoped, tag = 'scratch operand']
  #allocation5 [shape = 'f32[1,128]{1,0:T(1,128)}', space=vmem, size = 0x200, scoped, tag = 'scratch operand']
  #allocation6 [shape = 'f32[1,128]{1,0:T(1,128)}', space=vmem, size = 0x200, scoped, tag = 'scratch operand']
  #allocation7 [shape = 'f32[1,128]{1,0:T(1,128)}', space=vmem, size = 0x200, scoped, tag = 'scratch operand']
  %s0 = inlined_call_operand.vmem [shape: bf16[2,8,16,8], index: 0, kind: input, shape index: {}]
  %s1 = inlined_call_operand.vmem [shape: bf16[2,8,128], index: 1, kind: input, shape index: {}]
  %s2 = inlined_call_operand.vmem [shape: f32[2,1,128], index: 2, kind: input, shape index: {}]
  %s3 = inlined_call_operand.vmem [shape: f32[2,1,128], index: 3, kind: input, shape index: {}]
  %s4 = inlined_call_operand.vmem [shape: bf16[2,128,128], index: 4, kind: input, shape index: {}]
  %s5 = inlined_call_operand.vmem [shape: f32[2,1,128], index: 5, kind: input, shape index: {}]
  %s6 = inlined_call_operand.vmem [shape: f32[2,1,128], index: 6, kind: input, shape index: {}]
  %s7 = inlined_call_operand.hbm [shape: f32[2,16,32], index: 7, kind: output, shape index: {0}]
  %s8 = inlined_call_operand.hbm [shape: f32[2,16,32], index: 8, kind: output, shape index: {1}]
  %s9 = inlined_call_operand.hbm [shape: f32[2,1,32], index: 9, kind: output, shape index: {2}]
  %s10 = inlined_call_operand.hbm [shape: f32[2,1,32], index: 10, kind: output, shape index: {3}]
  %11 = xla_tuple %s7, %s8, %s9, %s10
  %s12 = sld [smem:[#allocation0]]
  $region105: #{tpu_custom_call.1} parent=0
    _
  %s14 = ssub.s32 1, %s12
  %s15 = scalar_select 0, %s14, %s12
  $region1: #{tpu_custom_call.1} parent=0
    #allocation8 [shape = 'u8[16384]{0}', space=vmem, size = 0x4000, scoped, tag = 'output window, operand 0']
    #allocation9 [shape = 's32[2]{0}', space=sflag, size = 0x8, scoped, tag = 'scoped memory for tpu_custom_call.1']
    #allocation10 [shape = 'u8[16384]{0}', space=vmem, size = 0x4000, scoped, tag = 'output window, operand 1']
    #allocation11 [shape = 's32[2]{0}', space=sflag, size = 0x8, scoped, tag = 'scoped memory for tpu_custom_call.1']
    #allocation12 [shape = 'u8[1024]{0}', space=vmem, size = 0x400, scoped, tag = 'output window, operand 2']
    #allocation13 [shape = 'u8[1024]{0}', space=vmem, size = 0x400, scoped, tag = 'output window, operand 3']
    #allocation14 [shape = 's32[2]{0}', space=sflag, size = 0x8, scoped, tag = 'scoped memory for tpu_custom_call.1']
    %16 = vsyncpa [#allocation9], 0
    %s17 = scalar_lea.sflag [#allocation9], 1
    %18 = vsyncpa %s17, 0
    %19 = vsyncpa [#allocation11], 0
    %s20 = scalar_lea.sflag [#allocation11], 1
    %21 = vsyncpa %s20, 0
    %22 = vsyncpa [#allocation14], 0
    %s23 = scalar_lea.sflag [#allocation14], 1
    %24 = vsyncpa %s23, 0
    loop: start=0, step=1, limit=6
    $region2: #{tpu_custom_call.1} parent=1 // loop_pre_header
      _
    $region3: #{tpu_custom_call.1} parent=1 // loop_header
      %s26 = sphi 0, %s30
      %p27 = scmp.ge.s32.totalorder %s26, 6
      %s33 = sphi 0, %s52
      %s34 = sphi 0, %s48
      %s35 = sphi 0, %s44
      %s36 = sphi 0, %s33
      %s37 = sphi 0, %s34
      %s38 = sphi 0, %s35
      %s39 = sphi 0, %s36
      %s40 = sphi 0, %s37
      %s41 = sphi 0, %s38
      %s57 = sphi 0, %s59
      %s60 = sphi 0, %s57
      %s61 = sphi 0, %s60
      %s77 = sphi 0, %s61
      %s83 = sphi 0, %s85
      %s86 = sphi 0, %s83
      %s87 = sphi 0, %s86
      %s103 = sphi 0, %s87
      %s109 = sphi 0, %s111
      %s112 = sphi 0, %s109
      %s113 = sphi 0, %s112
      %s129 = sphi 0, %s113
      %s135 = sphi 0, %s137
      %s138 = sphi 0, %s135
      %s139 = sphi 0, %s138
      %s155 = sphi 0, %s139
      %s161 = sphi 0, %s163
      %s164 = sphi 0, %s161
      %s165 = sphi 0, %s164
      %s181 = sphi 0, %s165
      %s187 = sphi 0, %s189
      %s190 = sphi 0, %s187
      %s191 = sphi 0, %s190
      %s207 = sphi 0, %s191
      %s213 = sphi 0, %s215
      %s216 = sphi 0, %s213
      %s217 = sphi 0, %s216
      %s233 = sphi 0, %s217
      %s245 = sphi 0, %s247
      %s248 = sphi 0, %s245
      %s249 = sphi 0, %s248
      %s265 = sphi 0, %s249
      %s277 = sphi 0, %s279
      %s280 = sphi 0, %s277
      %s281 = sphi 0, %s280
      %s297 = sphi 0, %s281
      %s303 = sphi 0, %s305
      %s306 = sphi 0, %s303
      %s307 = sphi 0, %s306
      %s323 = sphi 0, %s307
      %s329 = sphi 0, %s331
      %s332 = sphi 0, %s329
      %s333 = sphi 0, %s332
      %s349 = sphi 0, %s333
    $region4: #{tpu_custom_call.1} parent=1 // loop_header_branch
      %29 = sbr.rel (%p27) target = $region8
    $region5: #{tpu_custom_call.1} parent=1 // loop_body
      %s31 = ssub.s32 %s26, 1
      %s32 = ssub.s32 %s26, 2
      %s42 = sadd.s32 1, %s35
      %p43 = scmp.ge.s32.totalorder %s42, 1
      %s44 = scalar_select %p43, 0, %s42
      %s45 = sadd.s32 1, %s34
      %s46 = scalar_select %p43, %s45, %s34
      %p47 = scmp.ge.s32.totalorder %s46, 2
      %s48 = scalar_select %p47, 0, %s46
      %s49 = sadd.s32 1, %s33
      %s50 = scalar_select %p47, %s49, %s33
      %p51 = scmp.ge.s32.totalorder %s50, 2
      %s52 = scalar_select %p51, 0, %s50
      %s53 = ssub.s32 %s33, %s52
      %s54 = ssub.s32 %s35, %s44
      %s55 = sor.u32 %s53, %s54
      %p56 = scmp.eq.s32.totalorder %s55, 0
      %s58 = sadd.s32 %s57, 1
      %s59 = scalar_select %p56, %s57, %s58
      %p62 = pneg %p56
      %p63 = scmp.eq.s32.totalorder %s26, 3
      %p64 = por %p62, %p63
      %p65 = scmp.ne.s32.totalorder %s57, %s60
      %p66 = scmp.eq.s32.totalorder %s26, 0
      %p67 = por %p65, %p66
      %p68 = scmp.ne.s32.totalorder %s57, %s60
      %p69 = scmp.eq.s32.totalorder %s31, 3
      %p70 = por %p68, %p69
      %p71 = scmp.ne.s32.totalorder %s60, %s61
      %p72 = scmp.eq.s32.totalorder %s31, 0
      %p73 = por %p71, %p72
      %p74 = scmp.ne.s32.totalorder %s60, %s61
      %p75 = scmp.eq.s32.totalorder %s32, 3
      %p76 = por %p74, %p75
      %p78 = scmp.ne.s32.totalorder %s61, %s77
      %p79 = scmp.eq.s32.totalorder %s32, 0
      %p80 = por %p78, %p79
      %s81 = ssub.s32 %s33, %s52
      %p82 = scmp.eq.s32.totalorder %s81, 0
      %s84 = sadd.s32 %s83, 1
      %s85 = scalar_select %p82, %s83, %s84
      %p88 = pneg %p82
      %p89 = scmp.eq.s32.totalorder %s26, 3
      %p90 = por %p88, %p89
      %p91 = scmp.ne.s32.totalorder %s83, %s86
      %p92 = scmp.eq.s32.totalorder %s26, 0
      %p93 = por %p91, %p92
      %p94 = scmp.ne.s32.totalorder %s83, %s86
      %p95 = scmp.eq.s32.totalorder %s31, 3
      %p96 = por %p94, %p95
      %p97 = scmp.ne.s32.totalorder %s86, %s87
      %p98 = scmp.eq.s32.totalorder %s31, 0
      %p99 = por %p97, %p98
      %p100 = scmp.ne.s32.totalorder %s86, %s87
      %p101 = scmp.eq.s32.totalorder %s32, 3
      %p102 = por %p100, %p101
      %p104 = scmp.ne.s32.totalorder %s87, %s103
      %p105 = scmp.eq.s32.totalorder %s32, 0
      %p106 = por %p104, %p105
      %s107 = ssub.s32 %s33, %s52
      %p108 = scmp.eq.s32.totalorder %s107, 0
      %s110 = sadd.s32 %s109, 1
      %s111 = scalar_select %p108, %s109, %s110
      %p114 = pneg %p108
      %p115 = scmp.eq.s32.totalorder %s26, 3
      %p116 = por %p114, %p115
      %p117 = scmp.ne.s32.totalorder %s109, %s112
      %p118 = scmp.eq.s32.totalorder %s26, 0
      %p119 = por %p117, %p118
      %p120 = scmp.ne.s32.totalorder %s109, %s112
      %p121 = scmp.eq.s32.totalorder %s31, 3
      %p122 = por %p120, %p121
      %p123 = scmp.ne.s32.totalorder %s112, %s113
      %p124 = scmp.eq.s32.totalorder %s31, 0
      %p125 = por %p123, %p124
      %p126 = scmp.ne.s32.totalorder %s112, %s113
      %p127 = scmp.eq.s32.totalorder %s32, 3
      %p128 = por %p126, %p127
      %p130 = scmp.ne.s32.totalorder %s113, %s129
      %p131 = scmp.eq.s32.totalorder %s32, 0
      %p132 = por %p130, %p131
      %s133 = ssub.s32 %s33, %s52
      %p134 = scmp.eq.s32.totalorder %s133, 0
      %s136 = sadd.s32 %s135, 1
      %s137 = scalar_select %p134, %s135, %s136
      %p140 = pneg %p134
      %p141 = scmp.eq.s32.totalorder %s26, 3
      %p142 = por %p140, %p141
      %p143 = scmp.ne.s32.totalorder %s135, %s138
      %p144 = scmp.eq.s32.totalorder %s26, 0
      %p145 = por %p143, %p144
      %p146 = scmp.ne.s32.totalorder %s135, %s138
      %p147 = scmp.eq.s32.totalorder %s31, 3
      %p148 = por %p146, %p147
      %p149 = scmp.ne.s32.totalorder %s138, %s139
      %p150 = scmp.eq.s32.totalorder %s31, 0
      %p151 = por %p149, %p150
      %p152 = scmp.ne.s32.totalorder %s138, %s139
      %p153 = scmp.eq.s32.totalorder %s32, 3
      %p154 = por %p152, %p153
      %p156 = scmp.ne.s32.totalorder %s139, %s155
      %p157 = scmp.eq.s32.totalorder %s32, 0
      %p158 = por %p156, %p157
      %s159 = ssub.s32 %s33, %s52
      %p160 = scmp.eq.s32.totalorder %s159, 0
      %s162 = sadd.s32 %s161, 1
      %s163 = scalar_select %p160, %s161, %s162
      %p166 = pneg %p160
      %p167 = scmp.eq.s32.totalorder %s26, 3
      %p168 = por %p166, %p167
      %p169 = scmp.ne.s32.totalorder %s161, %s164
      %p170 = scmp.eq.s32.totalorder %s26, 0
      %p171 = por %p169, %p170
      %p172 = scmp.ne.s32.totalorder %s161, %s164
      %p173 = scmp.eq.s32.totalorder %s31, 3
      %p174 = por %p172, %p173
      %p175 = scmp.ne.s32.totalorder %s164, %s165
      %p176 = scmp.eq.s32.totalorder %s31, 0
      %p177 = por %p175, %p176
      %p178 = scmp.ne.s32.totalorder %s164, %s165
      %p179 = scmp.eq.s32.totalorder %s32, 3
      %p180 = por %p178, %p179
      %p182 = scmp.ne.s32.totalorder %s165, %s181
      %p183 = scmp.eq.s32.totalorder %s32, 0
      %p184 = por %p182, %p183
      %s185 = ssub.s32 %s33, %s52
      %p186 = scmp.eq.s32.totalorder %s185, 0
      %s188 = sadd.s32 %s187, 1
      %s189 = scalar_select %p186, %s187, %s188
      %p192 = pneg %p186
      %p193 = scmp.eq.s32.totalorder %s26, 3
      %p194 = por %p192, %p193
      %p195 = scmp.ne.s32.totalorder %s187, %s190
      %p196 = scmp.eq.s32.totalorder %s26, 0
      %p197 = por %p195, %p196
      %p198 = scmp.ne.s32.totalorder %s187, %s190
      %p199 = scmp.eq.s32.totalorder %s31, 3
      %p200 = por %p198, %p199
      %p201 = scmp.ne.s32.totalorder %s190, %s191
      %p202 = scmp.eq.s32.totalorder %s31, 0
      %p203 = por %p201, %p202
      %p204 = scmp.ne.s32.totalorder %s190, %s191
      %p205 = scmp.eq.s32.totalorder %s32, 3
      %p206 = por %p204, %p205
      %p208 = scmp.ne.s32.totalorder %s191, %s207
      %p209 = scmp.eq.s32.totalorder %s32, 0
      %p210 = por %p208, %p209
      %s211 = ssub.s32 %s33, %s52
      %p212 = scmp.eq.s32.totalorder %s211, 0
      %s214 = sadd.s32 %s213, 1
      %s215 = scalar_select %p212, %s213, %s214
      %p218 = pneg %p212
      %p219 = scmp.eq.s32.totalorder %s26, 3
      %p220 = por %p218, %p219
      %p221 = scmp.ne.s32.totalorder %s213, %s216
      %p222 = scmp.eq.s32.totalorder %s26, 0
      %p223 = por %p221, %p222
      %p224 = scmp.ne.s32.totalorder %s213, %s216
      %p225 = scmp.eq.s32.totalorder %s31, 3
      %p226 = por %p224, %p225
      %p227 = scmp.ne.s32.totalorder %s216, %s217
      %p228 = scmp.eq.s32.totalorder %s31, 0
      %p229 = por %p227, %p228
      %p230 = scmp.ne.s32.totalorder %s216, %s217
      %p231 = scmp.eq.s32.totalorder %s32, 3
      %p232 = por %p230, %p231
      %p234 = scmp.ne.s32.totalorder %s217, %s233
      %p235 = scmp.eq.s32.totalorder %s32, 0
      %p236 = por %p234, %p235
      %p237 = scmp.eq.s32.totalorder %s34, 1
      %s238 = scalar_select %p237, %s35, 0
      %p239 = scmp.eq.s32.totalorder %s48, 1
      %s240 = scalar_select %p239, %s44, 0
      %s241 = ssub.s32 %s33, %s52
      %s242 = ssub.s32 %s238, %s240
      %s243 = sor.u32 %s241, %s242
      %p244 = scmp.eq.s32.totalorder %s243, 0
      %s246 = sadd.s32 %s245, 1
      %s247 = scalar_select %p244, %s245, %s246
      %p250 = pneg %p244
      %p251 = scmp.eq.s32.totalorder %s26, 3
      %p252 = por %p250, %p251
      %p253 = scmp.ne.s32.totalorder %s245, %s248
      %p254 = scmp.eq.s32.totalorder %s26, 0
      %p255 = por %p253, %p254
      %p256 = scmp.ne.s32.totalorder %s245, %s248
      %p257 = scmp.eq.s32.totalorder %s31, 3
      %p258 = por %p256, %p257
      %p259 = scmp.ne.s32.totalorder %s248, %s249
      %p260 = scmp.eq.s32.totalorder %s31, 0
      %p261 = por %p259, %p260
      %p262 = scmp.ne.s32.totalorder %s248, %s249
      %p263 = scmp.eq.s32.totalorder %s32, 3
      %p264 = por %p262, %p263
      %p266 = scmp.ne.s32.totalorder %s249, %s265
      %p267 = scmp.eq.s32.totalorder %s32, 0
      %p268 = por %p266, %p267
      %p269 = scmp.eq.s32.totalorder %s34, 1
      %s270 = scalar_select %p269, %s35, 0
      %p271 = scmp.eq.s32.totalorder %s48, 1
      %s272 = scalar_select %p271, %s44, 0
      %s273 = ssub.s32 %s33, %s52
      %s274 = ssub.s32 %s270, %s272
      %s275 = sor.u32 %s273, %s274
      %p276 = scmp.eq.s32.totalorder %s275, 0
      %s278 = sadd.s32 %s277, 1
      %s279 = scalar_select %p276, %s277, %s278
      %p282 = pneg %p276
      %p283 = scmp.eq.s32.totalorder %s26, 3
      %p284 = por %p282, %p283
      %p285 = scmp.ne.s32.totalorder %s277, %s280
      %p286 = scmp.eq.s32.totalorder %s26, 0
      %p287 = por %p285, %p286
      %p288 = scmp.ne.s32.totalorder %s277, %s280
      %p289 = scmp.eq.s32.totalorder %s31, 3
      %p290 = por %p288, %p289
      %p291 = scmp.ne.s32.totalorder %s280, %s281
      %p292 = scmp.eq.s32.totalorder %s31, 0
      %p293 = por %p291, %p292
      %p294 = scmp.ne.s32.totalorder %s280, %s281
      %p295 = scmp.eq.s32.totalorder %s32, 3
      %p296 = por %p294, %p295
      %p298 = scmp.ne.s32.totalorder %s281, %s297
      %p299 = scmp.eq.s32.totalorder %s32, 0
      %p300 = por %p298, %p299
      %s301 = ssub.s32 %s33, %s52
      %p302 = scmp.eq.s32.totalorder %s301, 0
      %s304 = sadd.s32 %s303, 1
      %s305 = scalar_select %p302, %s303, %s304
      %p308 = pneg %p302
      %p309 = scmp.eq.s32.totalorder %s26, 3
      %p310 = por %p308, %p309
      %p311 = scmp.ne.s32.totalorder %s303, %s306
      %p312 = scmp.eq.s32.totalorder %s26, 0
      %p313 = por %p311, %p312
      %p314 = scmp.ne.s32.totalorder %s303, %s306
      %p315 = scmp.eq.s32.totalorder %s31, 3
      %p316 = por %p314, %p315
      %p317 = scmp.ne.s32.totalorder %s306, %s307
      %p318 = scmp.eq.s32.totalorder %s31, 0
      %p319 = por %p317, %p318
      %p320 = scmp.ne.s32.totalorder %s306, %s307
      %p321 = scmp.eq.s32.totalorder %s32, 3
      %p322 = por %p320, %p321
      %p324 = scmp.ne.s32.totalorder %s307, %s323
      %p325 = scmp.eq.s32.totalorder %s32, 0
      %p326 = por %p324, %p325
      %s327 = ssub.s32 %s33, %s52
      %p328 = scmp.eq.s32.totalorder %s327, 0
      %s330 = sadd.s32 %s329, 1
      %s331 = scalar_select %p328, %s329, %s330
      %p334 = pneg %p328
      %p335 = scmp.eq.s32.totalorder %s26, 3
      %p336 = por %p334, %p335
      %p337 = scmp.ne.s32.totalorder %s329, %s332
      %p338 = scmp.eq.s32.totalorder %s26, 0
      %p339 = por %p337, %p338
      %p340 = scmp.ne.s32.totalorder %s329, %s332
      %p341 = scmp.eq.s32.totalorder %s31, 3
      %p342 = por %p340, %p341
      %p343 = scmp.ne.s32.totalorder %s332, %s333
      %p344 = scmp.eq.s32.totalorder %s31, 0
      %p345 = por %p343, %p344
      %p346 = scmp.ne.s32.totalorder %s332, %s333
      %p347 = scmp.eq.s32.totalorder %s32, 3
      %p348 = por %p346, %p347
      %p350 = scmp.ne.s32.totalorder %s333, %s349
      %p351 = scmp.eq.s32.totalorder %s32, 0
      %p352 = por %p350, %p351
      %p353 = scmp.le.s32.totalorder 1, %s26
      %p354 = scmp.lt.s32.totalorder %s26, 5
      %p355 = pnand %p353, %p354
      %p356 = pneg %p355
      // Predicated region
      $region9: #{tpu_custom_call.1} parent=5 // pred_check
        _
      $region10: #{tpu_custom_call.1} parent=5 // pred_check_branch
        %358 = sbr.rel (%p355) target = $region12
      $region11: #{tpu_custom_call.1} parent=5 // pred_region
        %s359 = ssub.s32 %s26, 1
      $region12: #{tpu_custom_call.1} parent=5 // pred_fallthru
        _
      %p360 = scmp.lt.s32.totalorder %s26, 4
      // Predicated region
      $region13: #{tpu_custom_call.1} parent=5 // pred_check
        %p361 = pneg %p360
      $region14: #{tpu_custom_call.1} parent=5 // pred_check_branch
        %363 = sbr.rel (%p361) target = $region16
      $region15: #{tpu_custom_call.1} parent=5 // pred_region
        // Predicated region
        $region17: #{tpu_custom_call.1} parent=15 // pred_check
          %p364 = pneg %p67
        $region18: #{tpu_custom_call.1} parent=15 // pred_check_branch
          %366 = sbr.rel (%p364) target = $region20
        $region19: #{tpu_custom_call.1} parent=15 // pred_region
          %s367 = smul.u32 2, %s35
          %p368 = scmp.lt.s32.totalorder %s33, 1
          %s369 = scalar_select %p368, %s33, 1
          %p370 = scmp.lt.s32.totalorder %s367, 1
          %s371 = scalar_select %p370, %s367, 1
          %s372 = smul.addr %s369, 16
          %s373 = sadd.s32 %s371, %s372
          %s374 = smul.addr %s373, 4
          %s375 = scalar_lea.vmem %s0, %s374
          %s376 = smul.u32 2, %s35
        $region20: #{tpu_custom_call.1} parent=15 // pred_fallthru
          _
        // Predicated region
        $region21: #{tpu_custom_call.1} parent=15 // pred_check
          %p377 = pneg %p93
        $region22: #{tpu_custom_call.1} parent=15 // pred_check_branch
          %379 = sbr.rel (%p377) target = $region24
        $region23: #{tpu_custom_call.1} parent=15 // pred_region
          %p380 = scmp.lt.s32.totalorder %s33, 1
          %s381 = scalar_select %p380, %s33, 1
          %s382 = smul.addr %s381, 4
          %s383 = scalar_lea.vmem %s1, %s382
        $region24: #{tpu_custom_call.1} parent=15 // pred_fallthru
          _
        // Predicated region
        $region25: #{tpu_custom_call.1} parent=15 // pred_check
          %p384 = pneg %p119
        $region26: #{tpu_custom_call.1} parent=15 // pred_check_branch
          %386 = sbr.rel (%p384) target = $region28
        $region27: #{tpu_custom_call.1} parent=15 // pred_region
          %p387 = scmp.lt.s32.totalorder %s33, 1
          %s388 = scalar_select %p387, %s33, 1
          %s389 = scalar_lea.vmem %s2, %s388
        $region28: #{tpu_custom_call.1} parent=15 // pred_fallthru
          _
        // Predicated region
        $region29: #{tpu_custom_call.1} parent=15 // pred_check
          %p390 = pneg %p145
        $region30: #{tpu_custom_call.1} parent=15 // pred_check_branch
          %392 = sbr.rel (%p390) target = $region32
        $region31: #{tpu_custom_call.1} parent=15 // pred_region
          %p393 = scmp.lt.s32.totalorder %s33, 1
          %s394 = scalar_select %p393, %s33, 1
          %s395 = scalar_lea.vmem %s3, %s394
        $region32: #{tpu_custom_call.1} parent=15 // pred_fallthru
          _
        // Predicated region
        $region33: #{tpu_custom_call.1} parent=15 // pred_check
          %p396 = pneg %p171
        $region34: #{tpu_custom_call.1} parent=15 // pred_check_branch
          %398 = sbr.rel (%p396) target = $region36
        $region35: #{tpu_custom_call.1} parent=15 // pred_region
          %p399 = scmp.lt.s32.totalorder %s33, 1
          %s400 = scalar_select %p399, %s33, 1
          %s401 = smul.addr %s400, 16
          %s402 = smul.addr %s401, 4
          %s403 = scalar_lea.vmem %s4, %s402
        $region36: #{tpu_custom_call.1} parent=15 // pred_fallthru
          _
        // Predicated region
        $region37: #{tpu_custom_call.1} parent=15 // pred_check
          %p404 = pneg %p197
        $region38: #{tpu_custom_call.1} parent=15 // pred_check_branch
          %406 = sbr.rel (%p404) target = $region40
        $region39: #{tpu_custom_call.1} parent=15 // pred_region
          %p407 = scmp.lt.s32.totalorder %s33, 1
          %s408 = scalar_select %p407, %s33, 1
          %s409 = scalar_lea.vmem %s5, %s408
        $region40: #{tpu_custom_call.1} parent=15 // pred_fallthru
          _
        // Predicated region
        $region41: #{tpu_custom_call.1} parent=15 // pred_check
          %p410 = pneg %p223
        $region42: #{tpu_custom_call.1} parent=15 // pred_check_branch
          %412 = sbr.rel (%p410) target = $region44
        $region43: #{tpu_custom_call.1} parent=15 // pred_region
          %p413 = scmp.lt.s32.totalorder %s33, 1
          %s414 = scalar_select %p413, %s33, 1
          %s415 = scalar_lea.vmem %s6, %s414
        $region44: #{tpu_custom_call.1} parent=15 // pred_fallthru
          _
      $region16: #{tpu_custom_call.1} parent=5 // pred_fallthru
        _
      %p416 = scmp.le.s32.totalorder 1, %s26
      %p417 = scmp.lt.s32.totalorder %s26, 5
      %p418 = pnand %p416, %p417
      %p419 = pneg %p418
      // Predicated region
      $region45: #{tpu_custom_call.1} parent=5 // pred_check
        _
      $region46: #{tpu_custom_call.1} parent=5 // pred_check_branch
        %421 = sbr.rel (%p418) target = $region48
      $region47: #{tpu_custom_call.1} parent=5 // pred_region
        %s422 = ssub.s32 %s26, 1
        %s423 = smul.u32 2, %s38
        %p424 = scmp.lt.s32.totalorder %s36, 1
        %s425 = scalar_select %p424, %s36, 1
        %p426 = scmp.lt.s32.totalorder %s423, 1
        %s427 = scalar_select %p426, %s423, 1
        %s428 = smul.addr %s425, 16
        %s429 = sadd.s32 %s427, %s428
        %s430 = smul.addr %s429, 4
        %s431 = scalar_lea.vmem %s0, %s430
        %p432 = pneg %p73
        %p433 = pneg %p70
        %p434 = scmp.lt.s32.totalorder %s36, 1
        %s435 = scalar_select %p434, %s36, 1
        %s436 = smul.addr %s435, 4
        %s437 = scalar_lea.vmem %s1, %s436
        %p438 = pneg %p99
        %p439 = pneg %p96
        %p440 = scmp.lt.s32.totalorder %s36, 1
        %s441 = scalar_select %p440, %s36, 1
        %s442 = scalar_lea.vmem %s2, %s441
        %p443 = pneg %p125
        %p444 = pneg %p122
        %p445 = scmp.lt.s32.totalorder %s36, 1
        %s446 = scalar_select %p445, %s36, 1
        %s447 = scalar_lea.vmem %s3, %s446
        %p448 = pneg %p151
        %p449 = pneg %p148
        %p450 = scmp.lt.s32.totalorder %s36, 1
        %s451 = scalar_select %p450, %s36, 1
        %s452 = smul.addr %s451, 16
        %s453 = smul.addr %s452, 4
        %s454 = scalar_lea.vmem %s4, %s453
        %p455 = pneg %p177
        %p456 = pneg %p174
        %p457 = scmp.lt.s32.totalorder %s36, 1
        %s458 = scalar_select %p457, %s36, 1
        %s459 = scalar_lea.vmem %s5, %s458
        %p460 = pneg %p203
        %p461 = pneg %p200
        %p462 = scmp.lt.s32.totalorder %s36, 1
        %s463 = scalar_select %p462, %s36, 1
        %s464 = scalar_lea.vmem %s6, %s463
        %p465 = pneg %p229
        %p466 = pneg %p226
        %p467 = pneg %p261
        %p468 = pneg %p258
        %s469 = sand.u32 %s248, 1
        %s470 = scalar_lea.sflag [#allocation9], %s469
        %s471 = sand.u32 %s248, 1
        %s472 = smul.addr %s471, 16
        %s473 = scalar_lea.vmem [#allocation8], %s472
        %p474 = pneg %p293
        %p475 = pneg %p290
        %s476 = sand.u32 %s31, 1
        %s477 = scalar_lea.sflag [#allocation11], %s476
        %s478 = sand.u32 %s280, 1
        %s479 = smul.addr %s478, 16
        %s480 = scalar_lea.vmem [#allocation10], %s479
        %p481 = pneg %p319
        %p482 = pneg %p316
        %s483 = sand.u32 %s31, 1
        %s484 = scalar_lea.sflag [#allocation11], %s483
        %s485 = sand.u32 %s306, 1
        %s486 = scalar_lea.vmem [#allocation12], %s485
        %p487 = pneg %p345
        %p488 = pneg %p342
        %s489 = sand.u32 %s332, 1
        %s490 = scalar_lea.sflag [#allocation14], %s489
        %s491 = sand.u32 %s332, 1
        %s492 = scalar_lea.vmem [#allocation13], %s491
        %s493 = smul.u32 2, %s38
        %p494 = scmp.lt.s32.totalorder %s36, 1
        %s495 = scalar_select %p494, %s36, 1
        %p496 = scmp.lt.s32.totalorder %s493, 1
        %s497 = scalar_select %p496, %s493, 1
        %s498 = smul.addr %s495, 16
        %s499 = sadd.s32 %s497, %s498
        %s500 = smul.addr %s499, 4
        %s501 = scalar_lea.vmem %s0, %s500
        %s502 = smul.u32 2, %s38
        %p503 = scmp.lt.s32.totalorder %s36, 1
        %s504 = scalar_select %p503, %s36, 1
        %s505 = smul.addr %s504, 4
        %s506 = scalar_lea.vmem %s1, %s505
        %p507 = scmp.lt.s32.totalorder %s36, 1
        %s508 = scalar_select %p507, %s36, 1
        %s509 = scalar_lea.vmem %s2, %s508
        %p510 = scmp.lt.s32.totalorder %s36, 1
        %s511 = scalar_select %p510, %s36, 1
        %s512 = scalar_lea.vmem %s3, %s511
        %p513 = scmp.lt.s32.totalorder %s36, 1
        %s514 = scalar_select %p513, %s36, 1
        %s515 = smul.addr %s514, 16
        %s516 = smul.addr %s515, 4
        %s517 = scalar_lea.vmem %s4, %s516
        %p518 = scmp.lt.s32.totalorder %s36, 1
        %s519 = scalar_select %p518, %s36, 1
        %s520 = scalar_lea.vmem %s5, %s519
        %p521 = scmp.lt.s32.totalorder %s36, 1
        %s522 = scalar_select %p521, %s36, 1
        %s523 = scalar_lea.vmem %s6, %s522
        %p524 = scmp.eq.s32.totalorder %s37, 1
        %s525 = scalar_select %p524, %s38, 0
        %s526 = smul.u32 2, %s525
        %p527 = scmp.eq.s32.totalorder %s37, 1
        %s528 = scalar_select %p527, %s38, 0
        %s529 = smul.u32 2, %s528
        %p531 = scmp.eq.s32.totalorder %s37, 0
        %p532 = scmp.eq.s32.totalorder %s38, 0
        %p533 = pnand %p531, %p532
        %p534 = pneg %p533
        // Predicated region
        $region49: #{tpu_custom_call.1} parent=47 // pred_check
          _
        $region50: #{tpu_custom_call.1} parent=47 // pred_check_branch
          %536 = sbr.rel (%p533) target = $region52
        $region51: #{tpu_custom_call.1} parent=47 // pred_region
          %537 = vst [vmem:[#allocation2] sm:$0x1] 0.0
          %538 = vst [vmem:[#allocation3] sm:$0x1] 0.0
          %539 = vst [vmem:[#allocation4] sm:$0x1] 0.0
          %540 = vst [vmem:[#allocation5] sm:$0x1] 0.0
        $region52: #{tpu_custom_call.1} parent=47 // pred_fallthru
          _
        %v541 = vld [vmem:[%s501] sm:$0xf]
        %v542 = vld [vmem:[%s501 + $0x4] sm:$0xf]
        %v543 = vld [vmem:[%s501 + $0x8] sm:$0xf]
        %v544 = vld [vmem:[%s501 + $0xc] sm:$0xf]
        %v545 = vld [vmem:[%s501 + $0x10] sm:$0xf]
        %v546 = vld [vmem:[%s501 + $0x14] sm:$0xf]
        %v547 = vld [vmem:[%s501 + $0x18] sm:$0xf]
        %v548 = vld [vmem:[%s501 + $0x1c] sm:$0xf]
        %v549 = vld [vmem:[%s501 + $0x20] sm:$0xf]
        %v550 = vld [vmem:[%s501 + $0x24] sm:$0xf]
        %v551 = vld [vmem:[%s501 + $0x28] sm:$0xf]
        %v552 = vld [vmem:[%s501 + $0x2c] sm:$0xf]
        %v553 = vld [vmem:[%s501 + $0x30] sm:$0xf]
        %v554 = vld [vmem:[%s501 + $0x34] sm:$0xf]
        %v555 = vld [vmem:[%s501 + $0x38] sm:$0xf]
        %v556 = vld [vmem:[%s501 + $0x3c] sm:$0xf]
        %v557 = vld [vmem:[%s506] sm:$0xf]
        %v574 = vunpack.c.l.b16 %v541
        %v575 = vunpack.c.l.b16 %v542
        %v576 = vunpack.c.l.b16 %v543
        %v577 = vunpack.c.l.b16 %v544
        %v578 = vunpack.c.l.b16 %v545
        %v579 = vunpack.c.l.b16 %v546
        %v580 = vunpack.c.l.b16 %v547
        %v581 = vunpack.c.l.b16 %v548
        %v582 = vunpack.c.l.b16 %v549
        %v583 = vunpack.c.l.b16 %v550
        %v584 = vunpack.c.l.b16 %v551
        %v585 = vunpack.c.l.b16 %v552
        %v586 = vunpack.c.l.b16 %v553
        %v587 = vunpack.c.l.b16 %v554
        %v588 = vunpack.c.l.b16 %v555
        %v589 = vunpack.c.l.b16 %v556
        %v590 = vpack.c.b16 %v575, %v574
        %v591 = vpack.c.b16 %v577, %v576
        %v592 = vpack.c.b16 %v579, %v578
        %v593 = vpack.c.b16 %v581, %v580
        %v594 = vpack.c.b16 %v583, %v582
        %v595 = vpack.c.b16 %v585, %v584
        %v596 = vpack.c.b16 %v587, %v586
        %v597 = vpack.c.b16 %v589, %v588
        %vm598 = vcmask 64512
        %v600 = vsel %vm598, %v590, 0
        %v603 = vsel %vm598, %v591, 0
        %v606 = vsel %vm598, %v592, 0
        %v609 = vsel %vm598, %v593, 0
        %v612 = vsel %vm598, %v594, 0
        %v615 = vsel %vm598, %v595, 0
        %v618 = vsel %vm598, %v596, 0
        %v621 = vsel %vm598, %v597, 0
        %vm623 = vcmask 1043456
        %v625 = vsel %vm623, %v557, 0
        %627 = vmatprep.subr.bf16.mxu0 0
        %628 = vmatpush1.bf16.msra.mxu0 0
        %629 = vmatprep.subr.bf16.mxu0 0
        %630 = vmatpush1.bf16.msra.mxu0 0
        %631 = vmatprep.subr.bf16.mxu0 0
        %632 = vmatpush1.bf16.msra.mxu0 0
        %633 = vmatprep.subr.bf16.mxu0 0
        %634 = vmatpush1.bf16.msra.mxu0 0
        %635 = vmatprep.subr.bf16.mxu0 0
        %636 = vmatpush1.bf16.msra.mxu0 0
        %637 = vmatprep.subr.bf16.mxu0 0
        %638 = vmatpush1.bf16.msra.mxu0 0
        %639 = vmatprep.subr.bf16.mxu0 0
        %640 = vmatpush1.bf16.msra.mxu0 0
        %641 = vmatprep.subr.bf16.mxu0 0
        %642 = vmatpush1.bf16.msra.mxu0 %v625
        %643 = vmatprep.subr.bf16.mxu0 0
        %644 = vmatpush2.bf16.msra.mxu0 0
        %645 = vmatprep.subr.bf16.mxu0 0
        %646 = vmatpush2.bf16.msra.mxu0 0
        %647 = vmatprep.subr.bf16.mxu0 0
        %648 = vmatpush2.bf16.msra.mxu0 0
        %649 = vmatprep.subr.bf16.mxu0 0
        %650 = vmatpush2.bf16.msra.mxu0 0
        %651 = vmatprep.subr.bf16.mxu0 0
        %652 = vmatpush2.bf16.msra.mxu0 0
        %653 = vmatprep.subr.bf16.mxu0 0
        %654 = vmatpush2.bf16.msra.mxu0 0
        %655 = vmatprep.subr.bf16.mxu0 0
        %656 = vmatpush2.bf16.msra.mxu0 0
        %657 = vmatprep.subr.bf16.mxu0 0
        %658 = vmatpush2.bf16.msra.mxu0 0
        %659 = vmatprep.mubr.bf16.mxu0 0
        %660 = vmatmul.mubr.bf16.gmra.mxu0 %v600
        %v661 = vpop.f32.mrf.mxu0
        %v662 = vadd.f32 0.0, %v661
        %v663 = vpop.f32.mrf.mxu0
        %v664 = vpop.f32.mrf.mxu0
        %v665 = vadd.f32 0.0, %v664
        %v666 = vpop.f32.mrf.mxu0
        %667 = vmatprep.mubr.bf16.mxu0 0
        %668 = vmatmul.mubr.bf16.gmra.mxu0 %v603
        %v669 = vpop.f32.mrf.mxu0
        %v670 = vadd.f32 0.0, %v669
        %v671 = vpop.f32.mrf.mxu0
        %v672 = vpop.f32.mrf.mxu0
        %v673 = vadd.f32 0.0, %v672
        %v674 = vpop.f32.mrf.mxu0
        %675 = vmatprep.mubr.bf16.mxu0 0
        %676 = vmatmul.mubr.bf16.gmra.mxu0 %v606
        %v677 = vpop.f32.mrf.mxu0
        %v678 = vadd.f32 0.0, %v677
        %v679 = vpop.f32.mrf.mxu0
        %v680 = vpop.f32.mrf.mxu0
        %v681 = vadd.f32 0.0, %v680
        %v682 = vpop.f32.mrf.mxu0
        %683 = vmatprep.mubr.bf16.mxu0 0
        %684 = vmatmul.mubr.bf16.gmra.mxu0 %v609
        %v685 = vpop.f32.mrf.mxu0
        %v686 = vadd.f32 0.0, %v685
        %v687 = vpop.f32.mrf.mxu0
        %v688 = vpop.f32.mrf.mxu0
        %v689 = vadd.f32 0.0, %v688
        %v690 = vpop.f32.mrf.mxu0
        %691 = vmatprep.mubr.bf16.mxu0 0
        %692 = vmatmul.mubr.bf16.gmra.mxu0 %v612
        %v693 = vpop.f32.mrf.mxu0
        %v694 = vadd.f32 0.0, %v693
        %v695 = vpop.f32.mrf.mxu0
        %v696 = vpop.f32.mrf.mxu0
        %v697 = vadd.f32 0.0, %v696
        %v698 = vpop.f32.mrf.mxu0
        %699 = vmatprep.mubr.bf16.mxu0 0
        %700 = vmatmul.mubr.bf16.gmra.mxu0 %v615
        %v701 = vpop.f32.mrf.mxu0
        %v702 = vadd.f32 0.0, %v701
        %v703 = vpop.f32.mrf.mxu0
        %v704 = vpop.f32.mrf.mxu0
        %v705 = vadd.f32 0.0, %v704
        %v706 = vpop.f32.mrf.mxu0
        %707 = vmatprep.mubr.bf16.mxu0 0
        %708 = vmatmul.mubr.bf16.gmra.mxu0 %v618
        %v709 = vpop.f32.mrf.mxu0
        %v710 = vadd.f32 0.0, %v709
        %v711 = vpop.f32.mrf.mxu0
        %v712 = vpop.f32.mrf.mxu0
        %v713 = vadd.f32 0.0, %v712
        %v714 = vpop.f32.mrf.mxu0
        %715 = vmatprep.mubr.bf16.mxu0 0
        %716 = vmatmul.mubr.bf16.gmra.mxu0 %v621
        %v717 = vpop.f32.mrf.mxu0
        %v718 = vadd.f32 0.0, %v717
        %v719 = vpop.f32.mrf.mxu0
        %v720 = vpop.f32.mrf.mxu0
        %v721 = vadd.f32 0.0, %v720
        %v722 = vpop.f32.mrf.mxu0
        %723 = vdwg.mxu0
        // Predicated region
        $region53: #{tpu_custom_call.1} parent=47 // pred_check
          %p724 = pneg %p531
        $region54: #{tpu_custom_call.1} parent=47 // pred_check_branch
          %726 = sbr.rel (%p724) target = $region56
        $region55: #{tpu_custom_call.1} parent=47 // pred_region
          %v727 = vld [vmem:[#allocation2] sm:$0x1]
          %v728 = vadd.f32 %v662, %v665
          %v729 = vadd.f32 %v728, %v670
          %v730 = vadd.f32 %v729, %v673
          %v731 = vadd.f32 %v730, %v678
          %v732 = vadd.f32 %v731, %v681
          %v733 = vadd.f32 %v732, %v686
          %v734 = vadd.f32 %v733, %v689
          %v735 = vadd.f32 %v734, %v694
          %v736 = vadd.f32 %v735, %v697
          %v737 = vadd.f32 %v736, %v702
          %v738 = vadd.f32 %v737, %v705
          %v739 = vadd.f32 %v738, %v710
          %v740 = vadd.f32 %v739, %v713
          %v741 = vadd.f32 %v740, %v718
          %v742 = vadd.f32 %v741, %v721
          %v743 = vrot.slane %v742, 4
          %v744 = vadd.f32 %v742, %v743
          %v745 = vrot.slane %v744, 2
          %v746 = vadd.f32 %v744, %v745
          %v747 = vrot.slane %v746, 1
          %v748 = vadd.f32 %v746, %v747
          %v749 = vadd.f32 %v727, %v748
          %750 = vst [vmem:[#allocation2] sm:$0x1] %v749
          %v751 = vld [vmem:[#allocation3] sm:$0x1]
          %v752 = vmul.f32 %v662, %v662
          %v753 = vmul.f32 %v665, %v665
          %v754 = vmul.f32 %v670, %v670
          %v755 = vmul.f32 %v673, %v673
          %v756 = vmul.f32 %v678, %v678
          %v757 = vmul.f32 %v681, %v681
          %v758 = vmul.f32 %v686, %v686
          %v759 = vmul.f32 %v689, %v689
          %v760 = vmul.f32 %v694, %v694
          %v761 = vmul.f32 %v697, %v697
          %v762 = vmul.f32 %v702, %v702
          %v763 = vmul.f32 %v705, %v705
          %v764 = vmul.f32 %v710, %v710
          %v765 = vmul.f32 %v713, %v713
          %v766 = vmul.f32 %v718, %v718
          %v767 = vmul.f32 %v721, %v721
          %v768 = vadd.f32 %v752, %v753
          %v769 = vadd.f32 %v768, %v754
          %v770 = vadd.f32 %v769, %v755
          %v771 = vadd.f32 %v770, %v756
          %v772 = vadd.f32 %v771, %v757
          %v773 = vadd.f32 %v772, %v758
          %v774 = vadd.f32 %v773, %v759
          %v775 = vadd.f32 %v774, %v760
          %v776 = vadd.f32 %v775, %v761
          %v777 = vadd.f32 %v776, %v762
          %v778 = vadd.f32 %v777, %v763
          %v779 = vadd.f32 %v778, %v764
          %v780 = vadd.f32 %v779, %v765
          %v781 = vadd.f32 %v780, %v766
          %v782 = vadd.f32 %v781, %v767
          %v783 = vrot.slane %v782, 4
          %v784 = vadd.f32 %v782, %v783
          %v785 = vrot.slane %v784, 2
          %v786 = vadd.f32 %v784, %v785
          %v787 = vrot.slane %v786, 1
          %v788 = vadd.f32 %v786, %v787
          %v789 = vadd.f32 %v751, %v788
          %790 = vst [vmem:[#allocation3] sm:$0x1] %v789
        $region56: #{tpu_custom_call.1} parent=47 // pred_fallthru
          _
        // Predicated region
        $region57: #{tpu_custom_call.1} parent=47 // pred_check
          _
        $region58: #{tpu_custom_call.1} parent=47 // pred_check_branch
          %792 = sbr.rel (%p533) target = $region60
        $region59: #{tpu_custom_call.1} parent=47 // pred_region
          %v793 = vld [vmem:[#allocation2] sm:$0x1]
          %v794 = vmul.f32 %v793, 0.0078125
          %v795 = vld [vmem:[#allocation3] sm:$0x1]
          %v796 = vmul.f32 %v795, 0.0078125
          %v797 = vmul.f32 %v794, %v794
          %v798 = vsub.f32 %v796, %v797
          %v799 = vmax.f32 %v798, 0.0
          %v800 = vld [vmem:[%s509] sm:$0x1]
          %v801 = vadd.f32 %v799, 1e-05
          %v802 = vrsqrt.pop %v801
          %v803 = vmul.f32 %v800, %v802
          %v804 = vld [vmem:[%s512] sm:$0x1]
          %v805 = vmul.f32 %v794, %v803
          %v806 = vsub.f32 %v804, %v805
          %807 = vst [vmem:[#allocation6] sm:$0x1] %v803
          %808 = vst [vmem:[#allocation7] sm:$0x1] %v806
        $region60: #{tpu_custom_call.1} parent=47 // pred_fallthru
          _
        %p809 = scmp.gt.s32.totalorder %s37, 0
        // Predicated region
        $region61: #{tpu_custom_call.1} parent=47 // pred_check
          %p810 = pneg %p809
        $region62: #{tpu_custom_call.1} parent=47 // pred_check_branch
          %812 = sbr.rel (%p810) target = $region64
        $region63: #{tpu_custom_call.1} parent=47 // pred_region
          %v813 = vld [vmem:[#allocation6] sm:$0x1]
          %v815 = vlaneseq
          %v816 = vshrl.u32 %v815, 7
          %v817 = vsub.s32 0, %v816
          %v818 = vrot.slane %v813, %v817
          %v820 = vmul.f32 %v662, %v818
          %v821 = vmul.f32 %v665, %v818
          %v822 = vmul.f32 %v670, %v818
          %v823 = vmul.f32 %v673, %v818
          %v824 = vmul.f32 %v678, %v818
          %v825 = vmul.f32 %v681, %v818
          %v826 = vmul.f32 %v686, %v818
          %v827 = vmul.f32 %v689, %v818
          %v828 = vmul.f32 %v694, %v818
          %v829 = vmul.f32 %v697, %v818
          %v830 = vmul.f32 %v702, %v818
          %v831 = vmul.f32 %v705, %v818
          %v832 = vmul.f32 %v710, %v818
          %v833 = vmul.f32 %v713, %v818
          %v834 = vmul.f32 %v718, %v818
          %v835 = vmul.f32 %v721, %v818
          %v836 = vld [vmem:[#allocation7] sm:$0x1]
          %v838 = vlaneseq
          %v839 = vshrl.u32 %v838, 7
          %v840 = vsub.s32 0, %v839
          %v841 = vrot.slane %v836, %v840
          %v843 = vadd.f32 %v820, %v841
          %v844 = vadd.f32 %v821, %v841
          %v845 = vadd.f32 %v822, %v841
          %v846 = vadd.f32 %v823, %v841
          %v847 = vadd.f32 %v824, %v841
          %v848 = vadd.f32 %v825, %v841
          %v849 = vadd.f32 %v826, %v841
          %v850 = vadd.f32 %v827, %v841
          %v851 = vadd.f32 %v828, %v841
          %v852 = vadd.f32 %v829, %v841
          %v853 = vadd.f32 %v830, %v841
          %v854 = vadd.f32 %v831, %v841
          %v855 = vadd.f32 %v832, %v841
          %v856 = vadd.f32 %v833, %v841
          %v857 = vadd.f32 %v834, %v841
          %v858 = vadd.f32 %v835, %v841
          %v859 = vmax.f32 %v843, 0.0
          %v860 = vmax.f32 %v844, 0.0
          %v861 = vmax.f32 %v845, 0.0
          %v862 = vmax.f32 %v846, 0.0
          %v863 = vmax.f32 %v847, 0.0
          %v864 = vmax.f32 %v848, 0.0
          %v865 = vmax.f32 %v849, 0.0
          %v866 = vmax.f32 %v850, 0.0
          %v867 = vmax.f32 %v851, 0.0
          %v868 = vmax.f32 %v852, 0.0
          %v869 = vmax.f32 %v853, 0.0
          %v870 = vmax.f32 %v854, 0.0
          %v871 = vmax.f32 %v855, 0.0
          %v872 = vmax.f32 %v856, 0.0
          %v873 = vmax.f32 %v857, 0.0
          %v874 = vmax.f32 %v858, 0.0
          %v875 = vpack.c.bf16 %v860, %v859
          %v876 = vpack.c.bf16 %v862, %v861
          %v877 = vpack.c.bf16 %v864, %v863
          %v878 = vpack.c.bf16 %v866, %v865
          %v879 = vpack.c.bf16 %v868, %v867
          %v880 = vpack.c.bf16 %v870, %v869
          %v881 = vpack.c.bf16 %v872, %v871
          %v882 = vpack.c.bf16 %v874, %v873
          %v883 = vld [vmem:[%s517] sm:$0xf]
          %v884 = vld [vmem:[%s517 + $0x4] sm:$0xf]
          %v885 = vld [vmem:[%s517 + $0x8] sm:$0xf]
          %v886 = vld [vmem:[%s517 + $0xc] sm:$0xf]
          %v887 = vld [vmem:[%s517 + $0x10] sm:$0xf]
          %v888 = vld [vmem:[%s517 + $0x14] sm:$0xf]
          %v889 = vld [vmem:[%s517 + $0x18] sm:$0xf]
          %v890 = vld [vmem:[%s517 + $0x1c] sm:$0xf]
          %v891 = vld [vmem:[%s517 + $0x20] sm:$0xf]
          %v892 = vld [vmem:[%s517 + $0x24] sm:$0xf]
          %v893 = vld [vmem:[%s517 + $0x28] sm:$0xf]
          %v894 = vld [vmem:[%s517 + $0x2c] sm:$0xf]
          %v895 = vld [vmem:[%s517 + $0x30] sm:$0xf]
          %v896 = vld [vmem:[%s517 + $0x34] sm:$0xf]
          %v897 = vld [vmem:[%s517 + $0x38] sm:$0xf]
          %v898 = vld [vmem:[%s517 + $0x3c] sm:$0xf]
          %v915 = vunpack.c.l.b16 %v883
          %v916 = vunpack.c.l.b16 %v884
          %v917 = vunpack.c.l.b16 %v885
          %v918 = vunpack.c.l.b16 %v886
          %v919 = vunpack.c.l.b16 %v887
          %v920 = vunpack.c.l.b16 %v888
          %v921 = vunpack.c.l.b16 %v889
          %v922 = vunpack.c.l.b16 %v890
          %v923 = vunpack.c.l.b16 %v891
          %v924 = vunpack.c.l.b16 %v892
          %v925 = vunpack.c.l.b16 %v893
          %v926 = vunpack.c.l.b16 %v894
          %v927 = vunpack.c.l.b16 %v895
          %v928 = vunpack.c.l.b16 %v896
          %v929 = vunpack.c.l.b16 %v897
          %v930 = vunpack.c.l.b16 %v898
          %v931 = vpack.c.b16 %v916, %v915
          %v932 = vpack.c.b16 %v918, %v917
          %v933 = vpack.c.b16 %v920, %v919
          %v934 = vpack.c.b16 %v922, %v921
          %v935 = vpack.c.b16 %v924, %v923
          %v936 = vpack.c.b16 %v926, %v925
          %v937 = vpack.c.b16 %v928, %v927
          %v938 = vpack.c.b16 %v930, %v929
          %947 = vmatprep.subr.bf16.mxu0 0
          %948 = vmatpush1.bf16.msra.mxu0 %v938
          %949 = vmatprep.subr.bf16.mxu0 0
          %950 = vmatpush1.bf16.msra.mxu0 %v937
          %951 = vmatprep.subr.bf16.mxu0 0
          %952 = vmatpush1.bf16.msra.mxu0 %v936
          %953 = vmatprep.subr.bf16.mxu0 0
          %954 = vmatpush1.bf16.msra.mxu0 %v935
          %955 = vmatprep.subr.bf16.mxu0 0
          %956 = vmatpush1.bf16.msra.mxu0 %v934
          %957 = vmatprep.subr.bf16.mxu0 0
          %958 = vmatpush1.bf16.msra.mxu0 %v933
          %959 = vmatprep.subr.bf16.mxu0 0
          %960 = vmatpush1.bf16.msra.mxu0 %v932
          %961 = vmatprep.subr.bf16.mxu0 0
          %962 = vmatpush1.bf16.msra.mxu0 %v931
          %963 = vmatprep.subr.bf16.mxu0 0
          %964 = vmatpush2.bf16.msra.mxu0 0
          %965 = vmatprep.subr.bf16.mxu0 0
          %966 = vmatpush2.bf16.msra.mxu0 0
          %967 = vmatprep.subr.bf16.mxu0 0
          %968 = vmatpush2.bf16.msra.mxu0 0
          %969 = vmatprep.subr.bf16.mxu0 0
          %970 = vmatpush2.bf16.msra.mxu0 0
          %971 = vmatprep.subr.bf16.mxu0 0
          %972 = vmatpush2.bf16.msra.mxu0 0
          %973 = vmatprep.subr.bf16.mxu0 0
          %974 = vmatpush2.bf16.msra.mxu0 0
          %975 = vmatprep.subr.bf16.mxu0 0
          %976 = vmatpush2.bf16.msra.mxu0 0
          %977 = vmatprep.subr.bf16.mxu0 0
          %978 = vmatpush2.bf16.msra.mxu0 0
          %979 = vmatprep.mubr.bf16.mxu0 0
          %980 = vmatmul.mubr.bf16.gmra.mxu0 %v875
          %v981 = vpop.f32.mrf.mxu0
          %v982 = vadd.f32 0.0, %v981
          %v983 = vpop.f32.mrf.mxu0
          %v984 = vpop.f32.mrf.mxu0
          %v985 = vadd.f32 0.0, %v984
          %v986 = vpop.f32.mrf.mxu0
          %987 = vmatprep.mubr.bf16.mxu0 0
          %988 = vmatmul.mubr.bf16.gmra.mxu0 %v876
          %v989 = vpop.f32.mrf.mxu0
          %v990 = vadd.f32 0.0, %v989
          %v991 = vpop.f32.mrf.mxu0
          %v992 = vpop.f32.mrf.mxu0
          %v993 = vadd.f32 0.0, %v992
          %v994 = vpop.f32.mrf.mxu0
          %995 = vmatprep.mubr.bf16.mxu0 0
          %996 = vmatmul.mubr.bf16.gmra.mxu0 %v877
          %v997 = vpop.f32.mrf.mxu0
          %v998 = vadd.f32 0.0, %v997
          %v999 = vpop.f32.mrf.mxu0
          %v1000 = vpop.f32.mrf.mxu0
          %v1001 = vadd.f32 0.0, %v1000
          %v1002 = vpop.f32.mrf.mxu0
          %1003 = vmatprep.mubr.bf16.mxu0 0
          %1004 = vmatmul.mubr.bf16.gmra.mxu0 %v878
          %v1005 = vpop.f32.mrf.mxu0
          %v1006 = vadd.f32 0.0, %v1005
          %v1007 = vpop.f32.mrf.mxu0
          %v1008 = vpop.f32.mrf.mxu0
          %v1009 = vadd.f32 0.0, %v1008
          %v1010 = vpop.f32.mrf.mxu0
          %1011 = vmatprep.mubr.bf16.mxu0 0
          %1012 = vmatmul.mubr.bf16.gmra.mxu0 %v879
          %v1013 = vpop.f32.mrf.mxu0
          %v1014 = vadd.f32 0.0, %v1013
          %v1015 = vpop.f32.mrf.mxu0
          %v1016 = vpop.f32.mrf.mxu0
          %v1017 = vadd.f32 0.0, %v1016
          %v1018 = vpop.f32.mrf.mxu0
          %1019 = vmatprep.mubr.bf16.mxu0 0
          %1020 = vmatmul.mubr.bf16.gmra.mxu0 %v880
          %v1021 = vpop.f32.mrf.mxu0
          %v1022 = vadd.f32 0.0, %v1021
          %v1023 = vpop.f32.mrf.mxu0
          %v1024 = vpop.f32.mrf.mxu0
          %v1025 = vadd.f32 0.0, %v1024
          %v1026 = vpop.f32.mrf.mxu0
          %1027 = vmatprep.mubr.bf16.mxu0 0
          %1028 = vmatmul.mubr.bf16.gmra.mxu0 %v881
          %v1029 = vpop.f32.mrf.mxu0
          %v1030 = vadd.f32 0.0, %v1029
          %v1031 = vpop.f32.mrf.mxu0
          %v1032 = vpop.f32.mrf.mxu0
          %v1033 = vadd.f32 0.0, %v1032
          %v1034 = vpop.f32.mrf.mxu0
          %1035 = vmatprep.mubr.bf16.mxu0 0
          %1036 = vmatmul.mubr.bf16.gmra.mxu0 %v882
          %v1037 = vpop.f32.mrf.mxu0
          %v1038 = vadd.f32 0.0, %v1037
          %v1039 = vpop.f32.mrf.mxu0
          %v1040 = vpop.f32.mrf.mxu0
          %v1041 = vadd.f32 0.0, %v1040
          %v1042 = vpop.f32.mrf.mxu0
          %1043 = vdwg.mxu0
          %v1044 = vld [vmem:[#allocation4] sm:$0x1]
          %v1045 = vadd.f32 %v982, %v985
          %v1046 = vadd.f32 %v1045, %v990
          %v1047 = vadd.f32 %v1046, %v993
          %v1048 = vadd.f32 %v1047, %v998
          %v1049 = vadd.f32 %v1048, %v1001
          %v1050 = vadd.f32 %v1049, %v1006
          %v1051 = vadd.f32 %v1050, %v1009
          %v1052 = vadd.f32 %v1051, %v1014
          %v1053 = vadd.f32 %v1052, %v1017
          %v1054 = vadd.f32 %v1053, %v1022
          %v1055 = vadd.f32 %v1054, %v1025
          %v1056 = vadd.f32 %v1055, %v1030
          %v1057 = vadd.f32 %v1056, %v1033
          %v1058 = vadd.f32 %v1057, %v1038
          %v1059 = vadd.f32 %v1058, %v1041
          %v1060 = vrot.slane %v1059, 4
          %v1061 = vadd.f32 %v1059, %v1060
          %v1062 = vrot.slane %v1061, 2
          %v1063 = vadd.f32 %v1061, %v1062
          %v1064 = vrot.slane %v1063, 1
          %v1065 = vadd.f32 %v1063, %v1064
          %v1066 = vadd.f32 %v1044, %v1065
          %1067 = vst [vmem:[#allocation4] sm:$0x1] %v1066
          %v1068 = vld [vmem:[#allocation5] sm:$0x1]
          %v1069 = vmul.f32 %v982, %v982
          %v1070 = vmul.f32 %v985, %v985
          %v1071 = vmul.f32 %v990, %v990
          %v1072 = vmul.f32 %v993, %v993
          %v1073 = vmul.f32 %v998, %v998
          %v1074 = vmul.f32 %v1001, %v1001
          %v1075 = vmul.f32 %v1006, %v1006
          %v1076 = vmul.f32 %v1009, %v1009
          %v1077 = vmul.f32 %v1014, %v1014
          %v1078 = vmul.f32 %v1017, %v1017
          %v1079 = vmul.f32 %v1022, %v1022
          %v1080 = vmul.f32 %v1025, %v1025
          %v1081 = vmul.f32 %v1030, %v1030
          %v1082 = vmul.f32 %v1033, %v1033
          %v1083 = vmul.f32 %v1038, %v1038
          %v1084 = vmul.f32 %v1041, %v1041
          %v1085 = vadd.f32 %v1069, %v1070
          %v1086 = vadd.f32 %v1085, %v1071
          %v1087 = vadd.f32 %v1086, %v1072
          %v1088 = vadd.f32 %v1087, %v1073
          %v1089 = vadd.f32 %v1088, %v1074
          %v1090 = vadd.f32 %v1089, %v1075
          %v1091 = vadd.f32 %v1090, %v1076
          %v1092 = vadd.f32 %v1091, %v1077
          %v1093 = vadd.f32 %v1092, %v1078
          %v1094 = vadd.f32 %v1093, %v1079
          %v1095 = vadd.f32 %v1094, %v1080
          %v1096 = vadd.f32 %v1095, %v1081
          %v1097 = vadd.f32 %v1096, %v1082
          %v1098 = vadd.f32 %v1097, %v1083
          %v1099 = vadd.f32 %v1098, %v1084
          %v1100 = vrot.slane %v1099, 4
          %v1101 = vadd.f32 %v1099, %v1100
          %v1102 = vrot.slane %v1101, 2
          %v1103 = vadd.f32 %v1101, %v1102
          %v1104 = vrot.slane %v1103, 1
          %v1105 = vadd.f32 %v1103, %v1104
          %v1106 = vadd.f32 %v1068, %v1105
          %1107 = vst [vmem:[#allocation5] sm:$0x1] %v1106
          // Predicated region
          $region65: #{tpu_custom_call.1} parent=63 // pred_check
            %p1108 = pneg %p532
          $region66: #{tpu_custom_call.1} parent=63 // pred_check_branch
            %1110 = sbr.rel (%p1108) target = $region68
          $region67: #{tpu_custom_call.1} parent=63 // pred_region
            %v1111 = vld [vmem:[#allocation4] sm:$0x1]
            %v1112 = vmul.f32 %v1111, 0.0078125
            %v1113 = vld [vmem:[#allocation5] sm:$0x1]
            %v1114 = vmul.f32 %v1113, 0.0078125
            %v1115 = vmul.f32 %v1112, %v1112
            %v1116 = vsub.f32 %v1114, %v1115
            %v1117 = vmax.f32 %v1116, 0.0
            %v1118 = vld [vmem:[%s520] sm:$0x1]
            %v1119 = vadd.f32 %v1117, 1e-05
            %v1120 = vrsqrt.pop %v1119
            %v1121 = vmul.f32 %v1118, %v1120
            %v1122 = vld [vmem:[%s523] sm:$0x1]
            %v1123 = vmul.f32 %v1112, %v1121
            %v1124 = vsub.f32 %v1122, %v1123
            %vm1125 = vcmask 253952
            %1126 = vst.msk [vmem:[%s486] sm:$0x1] %vm1125, %v1121
            %1127 = vst.msk [vmem:[%s492] sm:$0x1] %vm1125, %v1124
          $region68: #{tpu_custom_call.1} parent=63 // pred_fallthru
            _
          %v1128 = vmax.f32 %v982, %v990
          %v1129 = vmax.f32 %v985, %v993
          %v1130 = vmin.f32 %v982, %v990
          %v1131 = vmin.f32 %v985, %v993
          %v1132 = vmax.f32 %v1128, %v998
          %v1133 = vmax.f32 %v1129, %v1001
          %v1134 = vmin.f32 %v1130, %v998
          %v1135 = vmin.f32 %v1131, %v1001
          %v1136 = vmax.f32 %v1132, %v1006
          %v1137 = vmax.f32 %v1133, %v1009
          %v1138 = vmin.f32 %v1134, %v1006
          %v1139 = vmin.f32 %v1135, %v1009
          %v1140 = vmax.f32 %v1136, %v1014
          %v1141 = vmax.f32 %v1137, %v1017
          %v1142 = vmin.f32 %v1138, %v1014
          %v1143 = vmin.f32 %v1139, %v1017
          %v1144 = vmax.f32 %v1140, %v1022
          %v1145 = vmax.f32 %v1141, %v1025
          %v1146 = vmin.f32 %v1142, %v1022
          %v1147 = vmin.f32 %v1143, %v1025
          %v1148 = vmax.f32 %v1144, %v1030
          %v1149 = vmax.f32 %v1145, %v1033
          %v1150 = vmin.f32 %v1146, %v1030
          %v1151 = vmin.f32 %v1147, %v1033
          %v1152 = vmax.f32 %v1148, %v1038
          %v1153 = vmax.f32 %v1149, %v1041
          %v1154 = vmin.f32 %v1150, %v1038
          %v1155 = vmin.f32 %v1151, %v1041
          %vm1156 = vcmask 261120
          %1157 = vst.msk [vmem:[%s473] sm:$0xff] %vm1156, %v1152
          %1158 = vst.msk [vmem:[%s473 + $0x8] sm:$0xff] %vm1156, %v1153
          %1159 = vst.msk [vmem:[%s480] sm:$0xff] %vm1156, %v1154
          %1160 = vst.msk [vmem:[%s480 + $0x8] sm:$0xff] %vm1156, %v1155
        $region64: #{tpu_custom_call.1} parent=47 // pred_fallthru
          _
        %s1161 = sand.u32 %s248, 1
        %s1162 = scalar_lea.sflag [#allocation9], %s1161
        %s1163 = sand.u32 %s248, 1
        %s1164 = smul.addr %s1163, 16
        %s1165 = scalar_lea.vmem [#allocation8], %s1164
        %s1166 = sand.u32 %s31, 1
        %s1167 = scalar_lea.sflag [#allocation11], %s1166
        %s1168 = sand.u32 %s280, 1
        %s1169 = smul.addr %s1168, 16
        %s1170 = scalar_lea.vmem [#allocation10], %s1169
        %s1171 = sand.u32 %s31, 1
        %s1172 = scalar_lea.sflag [#allocation11], %s1171
        %s1173 = sand.u32 %s306, 1
        %s1174 = scalar_lea.vmem [#allocation12], %s1173
        %s1175 = sand.u32 %s332, 1
        %s1176 = scalar_lea.sflag [#allocation14], %s1175
        %s1177 = sand.u32 %s332, 1
        %s1178 = scalar_lea.vmem [#allocation13], %s1177
        // Predicated region
        $region69: #{tpu_custom_call.1} parent=47 // pred_check
          %p1179 = pneg %p258
        $region70: #{tpu_custom_call.1} parent=47 // pred_check_branch
          %1181 = sbr.rel (%p1179) target = $region72
        $region71: #{tpu_custom_call.1} parent=47 // pred_region
          %p1182 = scmp.eq.s32.totalorder %s37, 1
          %s1183 = scalar_select %p1182, %s38, 0
          %s1184 = smul.u32 2, %s1183
          %s1186 = ssub.s32 256, 256
          %1187 = vsyncadd %s1162, %s1186
          %s1188 = smul.addr %s36, 2
          %s1189 = sadd.s32 %s1184, %s1188
          %s1190 = smul.addr %s1189, 128
          %s1191 = scalar_lea.hbm %s7, %s1190
          %s1192 = sshll.u32 %s1165, 4
          %s1193 = int_to_ptr.vmem [resolvable:$true] %s1192
          %1198 = dma.vmem_to_hbm [thread:$0]  %s1193, 256, %s1191, %s1162, 128, 128, 8
        $region72: #{tpu_custom_call.1} parent=47 // pred_fallthru
          _
        // Predicated region
        $region73: #{tpu_custom_call.1} parent=47 // pred_check
          %p1199 = pneg %p290
        $region74: #{tpu_custom_call.1} parent=47 // pred_check_branch
          %1201 = sbr.rel (%p1199) target = $region76
        $region75: #{tpu_custom_call.1} parent=47 // pred_region
          %p1202 = scmp.eq.s32.totalorder %s37, 1
          %s1203 = scalar_select %p1202, %s38, 0
          %s1204 = smul.u32 2, %s1203
          %s1206 = ssub.s32 256, 256
          %1207 = vsyncadd %s1167, %s1206
          %s1208 = smul.addr %s36, 2
          %s1209 = sadd.s32 %s1204, %s1208
          %s1210 = smul.addr %s1209, 128
          %s1211 = scalar_lea.hbm %s8, %s1210
          %s1212 = sshll.u32 %s1170, 4
          %s1213 = int_to_ptr.vmem [resolvable:$true] %s1212
          %1218 = dma.vmem_to_hbm [thread:$0]  %s1213, 256, %s1211, %s1167, 128, 128, 8
        $region76: #{tpu_custom_call.1} parent=47 // pred_fallthru
          _
        // Predicated region
        $region77: #{tpu_custom_call.1} parent=47 // pred_check
          %p1219 = pneg %p316
        $region78: #{tpu_custom_call.1} parent=47 // pred_check_branch
          %1221 = sbr.rel (%p1219) target = $region80
        $region79: #{tpu_custom_call.1} parent=47 // pred_region
          %s1223 = ssub.s32 16, 16
          %1224 = vsyncadd %s1172, %s1223
          %s1225 = smul.addr %s36, 16
          %s1226 = scalar_lea.hbm %s9, %s1225
          %s1228 = sshll.u32 %s1174, 4
          %s1229 = int_to_ptr.vmem [resolvable:$true] %s1228
          %1231 = dma.vmem_to_hbm [thread:$0]  %s1229, 16, %s1226, %s1172
        $region80: #{tpu_custom_call.1} parent=47 // pred_fallthru
          _
        // Predicated region
        $region81: #{tpu_custom_call.1} parent=47 // pred_check
          %p1232 = pneg %p342
        $region82: #{tpu_custom_call.1} parent=47 // pred_check_branch
          %1234 = sbr.rel (%p1232) target = $region84
        $region83: #{tpu_custom_call.1} parent=47 // pred_region
          %s1236 = ssub.s32 16, 16
          %1237 = vsyncadd %s1176, %s1236
          %s1238 = smul.addr %s36, 16
          %s1239 = scalar_lea.hbm %s10, %s1238
          %s1241 = sshll.u32 %s1178, 4
          %s1242 = int_to_ptr.vmem [resolvable:$true] %s1241
          %1244 = dma.vmem_to_hbm [thread:$0]  %s1242, 16, %s1239, %s1176
        $region84: #{tpu_custom_call.1} parent=47 // pred_fallthru
          _
      $region48: #{tpu_custom_call.1} parent=5 // pred_fallthru
        _
      %p1245 = scmp.le.s32.totalorder 2, %s26
      // Predicated region
      $region85: #{tpu_custom_call.1} parent=5 // pred_check
        %p1246 = pneg %p1245
      $region86: #{tpu_custom_call.1} parent=5 // pred_check_branch
        %1248 = sbr.rel (%p1246) target = $region88
      $region87: #{tpu_custom_call.1} parent=5 // pred_region
        %s1249 = ssub.s32 %s26, 2
        // Predicated region
        $region89: #{tpu_custom_call.1} parent=87 // pred_check
          %p1250 = pneg %p264
        $region90: #{tpu_custom_call.1} parent=87 // pred_check_branch
          %1252 = sbr.rel (%p1250) target = $region92
        $region91: #{tpu_custom_call.1} parent=87 // pred_region
          %s1253 = sand.u32 %s249, 1
          %s1254 = scalar_lea.sflag [#allocation9], %s1253
          %s1255 = sand.u32 %s249, 1
          %s1256 = smul.addr %s1255, 16
          %s1257 = scalar_lea.vmem [#allocation8], %s1256
          %1258 = dma.done %s1254, 256
        $region92: #{tpu_custom_call.1} parent=87 // pred_fallthru
          _
        // Predicated region
        $region93: #{tpu_custom_call.1} parent=87 // pred_check
          %p1259 = pneg %p296
        $region94: #{tpu_custom_call.1} parent=87 // pred_check_branch
          %1261 = sbr.rel (%p1259) target = $region96
        $region95: #{tpu_custom_call.1} parent=87 // pred_region
          %s1262 = sand.u32 %s32, 1
          %s1263 = scalar_lea.sflag [#allocation11], %s1262
          %s1264 = sand.u32 %s281, 1
          %s1265 = smul.addr %s1264, 16
          %s1266 = scalar_lea.vmem [#allocation10], %s1265
          %1267 = dma.done %s1263, 256
        $region96: #{tpu_custom_call.1} parent=87 // pred_fallthru
          _
        // Predicated region
        $region97: #{tpu_custom_call.1} parent=87 // pred_check
          %p1268 = pneg %p322
        $region98: #{tpu_custom_call.1} parent=87 // pred_check_branch
          %1270 = sbr.rel (%p1268) target = $region100
        $region99: #{tpu_custom_call.1} parent=87 // pred_region
          %s1271 = sand.u32 %s32, 1
          %s1272 = scalar_lea.sflag [#allocation11], %s1271
          %s1273 = sand.u32 %s307, 1
          %s1274 = scalar_lea.vmem [#allocation12], %s1273
          %1275 = dma.done %s1272, 16
        $region100: #{tpu_custom_call.1} parent=87 // pred_fallthru
          _
        // Predicated region
        $region101: #{tpu_custom_call.1} parent=87 // pred_check
          %p1276 = pneg %p348
        $region102: #{tpu_custom_call.1} parent=87 // pred_check_branch
          %1278 = sbr.rel (%p1276) target = $region104
        $region103: #{tpu_custom_call.1} parent=87 // pred_region
          %s1279 = sand.u32 %s333, 1
          %s1280 = scalar_lea.sflag [#allocation14], %s1279
          %s1281 = sand.u32 %s333, 1
          %s1282 = scalar_lea.vmem [#allocation13], %s1281
          %1283 = dma.done %s1280, 16
        $region104: #{tpu_custom_call.1} parent=87 // pred_fallthru
          _
      $region88: #{tpu_custom_call.1} parent=5 // pred_fallthru
        _
    $region6: #{tpu_custom_call.1} parent=1 // loop_footer
      %s30 = sadd.s32 1, %s26
    $region7: #{tpu_custom_call.1} parent=1 // loop_footer_branch
      %25 = sbr.rel target = $region3
    $region8: #{tpu_custom_call.1} parent=1 // loop_exit
      _
    %1284 = vsyncpa [#allocation9], 1
    %s1285 = scalar_lea.sflag [#allocation9], 1
    %1286 = vsyncpa %s1285, 1
    %1287 = vsyncpa [#allocation11], 1
    %s1288 = scalar_lea.sflag [#allocation11], 1
    %1289 = vsyncpa %s1288, 1
    %1290 = vsyncpa [#allocation14], 1
    %s1291 = scalar_lea.sflag [#allocation14], 1
    %1292 = vsyncpa %s1291, 1

</llo_original>
